<compile_context>
chip_gen: v7x
topology: tpu7x:2x2x1
jax: 0.10.0
libtpu: 0.0.40
codegen_flags: <defaults>
</compile_context>

<pallas_src>
import jax
import jax.numpy as jnp
from jax.experimental import pallas as pl
from jax.experimental.pallas import tpu as pltpu

IN_FEATURES = 1024
OUT_FEATURES = 512


def _mlp1_kernel(x_ref, w_ref, b_ref, o_ref):
    # x_ref: (B, K) f32   w_ref: (K, N) bf16   b_ref: (1, N) f32   o_ref: (B, N) f32
    x = x_ref[...].astype(jnp.bfloat16)  # cheap VPU cast; MXU runs bf16 x bf16 natively
    acc = jnp.dot(x, w_ref[...], preferred_element_type=jnp.float32)
    acc = acc + b_ref[...]
    o_ref[...] = jnp.maximum(acc, 0.0).astype(o_ref.dtype)


def mlp1_relu(x, w_bf16, b):
    """relu(x @ w + b) via a single-step Pallas TPU kernel.

    x: (B, K) float32, w_bf16: (K, N) bfloat16 (enforced), b: (N,) float32
    -> (B, N) float32
    """
    B, K = x.shape
    Kw, N = w_bf16.shape
    assert K == Kw and b.shape == (N,)
    assert K % 128 == 0 and N % 128 == 0 and B >= 1
    # Enforce the bf16 weight-streaming path (perf review): an f32 W would
    # double the dominant HBM term and hit v5e's non-bf16 MXU decomposition.
    assert w_bf16.dtype == jnp.bfloat16, "pre-cast weights to bfloat16 once, outside the hot loop"

    b2d = b.reshape(1, N).astype(jnp.float32)

    bytes_accessed = (
        x.size * x.dtype.itemsize
        + w_bf16.size * w_bf16.dtype.itemsize
        + b2d.size * b2d.dtype.itemsize
        + B * N * x.dtype.itemsize
    )
    cost = pl.CostEstimate(
        flops=2 * B * K * N, transcendentals=0, bytes_accessed=bytes_accessed
    )

    return pl.pallas_call(
        _mlp1_kernel,
        out_shape=jax.ShapeDtypeStruct((B, N), x.dtype),
        grid_spec=pltpu.PrefetchScalarGridSpec(
            num_scalar_prefetch=0,
            grid=(1,),  # single shot on every generation (see header)
            in_specs=[
                pl.BlockSpec((B, K), lambda j: (0, 0)),  # full activations (tiny)
                pl.BlockSpec((K, N), lambda j: (0, 0)),  # full weight matrix (1 MiB bf16)
                pl.BlockSpec((1, N), lambda j: (0, 0)),  # bias
            ],
            out_specs=pl.BlockSpec((B, N), lambda j: (0, 0)),
        ),
        compiler_params=pltpu.CompilerParams(
            dimension_semantics=("arbitrary",),
        ),
        cost_estimate=cost,
    )(x, w_bf16, b2d)


def init_params(key):
    """Deterministic init mimicking PyTorch nn.Linear default (U[-1/sqrt(in), 1/sqrt(in)])."""
    kw, kb = jax.random.split(key)
    bound = 1.0 / jnp.sqrt(jnp.float32(IN_FEATURES))
    # Stored as (in, out) so the kernel does x @ W directly.
    w = jax.random.uniform(
        kw, (IN_FEATURES, OUT_FEATURES), jnp.float32, minval=-bound, maxval=bound
    )
    b = jax.random.uniform(
        kb, (OUT_FEATURES,), jnp.float32, minval=-bound, maxval=bound
    )
    return w, b


if __name__ == "__main__":
    key = jax.random.PRNGKey(0)
    kx, kp = jax.random.split(key)

    B = 8  # small batch
    x = jax.random.normal(kx, (B, IN_FEATURES), dtype=jnp.float32)
    w, b = init_params(kp)

    # One-time weight cast, outside the hot path (halves dominant HBM traffic).
    w_bf16 = w.astype(jnp.bfloat16)

    out = mlp1_relu(x, w_bf16, b)
    out = jax.block_until_ready(out)
    assert out.shape == (B, OUT_FEATURES)

    # Tight check vs a reference computed with the same bf16 inputs / f32 accum.
    ref_bf16 = jnp.maximum(
        jnp.dot(x.astype(jnp.bfloat16), w_bf16, preferred_element_type=jnp.float32) + b,
        0.0,
    )
    assert jnp.allclose(out, ref_bf16, atol=2e-3, rtol=2e-3)

    # Relaxed check vs the full-f32 PyTorch-equivalent reference (bf16
    # quantization introduces ~1e-3-scale deviations).
    ref_f32 = jnp.maximum(x @ w + b, 0.0)
    assert jnp.allclose(out, ref_f32, atol=3e-2, rtol=3e-2)

    print("KERNEL_OK")
</pallas_src>

<mosaic_0001>
module attributes {stable_mosaic.version = 11 : i64} {
  func.func @_mlp1_kernel(%arg0: i32, %arg1: memref<8x1024xf32, #tpu.memory_space<vmem>>, %arg2: memref<1024x512xbf16, #tpu.memory_space<vmem>>, %arg3: memref<1x512xf32, #tpu.memory_space<vmem>>, %arg4: memref<8x512xf32, #tpu.memory_space<vmem>>) attributes {dimension_semantics = [#tpu.dimension_semantics<arbitrary>], iteration_bounds = array<i64: 1>, scalar_prefetch = 0 : i64, scratch_operands = 0 : i64, tpu.core_type = #tpu.core_type<tc>, window_params = [{pipeline_mode = #tpu.pipeline_mode<synchronous>, transform_indices = @transform_0, window_bounds = array<i64: 8, 1024>}, {pipeline_mode = #tpu.pipeline_mode<synchronous>, transform_indices = @transform_1, window_bounds = array<i64: 1024, 512>}, {pipeline_mode = #tpu.pipeline_mode<synchronous>, transform_indices = @transform_2, window_bounds = array<i64: 1, 512>}, {pipeline_mode = #tpu.pipeline_mode<synchronous>, transform_indices = @transform_3, window_bounds = array<i64: 8, 512>}]} {
    %c0 = arith.constant 0 : index
    %c0_0 = arith.constant 0 : index
    %0 = vector.load %arg1[%c0, %c0_0] : memref<8x1024xf32, #tpu.memory_space<vmem>>, vector<8x1024xf32>
    %1 = arith.truncf %0 : vector<8x1024xf32> to vector<8x1024xbf16>
    %c0_1 = arith.constant 0 : index
    %c0_2 = arith.constant 0 : index
    %2 = vector.load %arg2[%c0_1, %c0_2] : memref<1024x512xbf16, #tpu.memory_space<vmem>>, vector<1024x512xbf16>
    %cst = arith.constant dense<0.000000e+00> : vector<8x512xf32>
    %3 = tpu.matmul %1, %2, %cst {dimension_numbers = #tpu.dot_dimension_numbers<[1], [0], [0], [1], [0, 0, 1, 1], [], []>} : vector<8x1024xbf16>, vector<1024x512xbf16>, vector<8x512xf32> -> vector<8x512xf32>
    %c0_3 = arith.constant 0 : index
    %c0_4 = arith.constant 0 : index
    %4 = vector.load %arg3[%c0_3, %c0_4] : memref<1x512xf32, #tpu.memory_space<vmem>>, vector<1x512xf32>
    %5 = vector.broadcast %4 : vector<1x512xf32> to vector<8x512xf32>
    %6 = arith.addf %3, %5 : vector<8x512xf32>
    %cst_5 = arith.constant 0.000000e+00 : f32
    %7 = vector.broadcast %cst_5 : f32 to vector<8x512xf32>
    %8 = arith.maximumf %6, %7 : vector<8x512xf32>
    %c0_6 = arith.constant 0 : index
    %c0_7 = arith.constant 0 : index
    %9 = vector.load %arg4[%c0_6, %c0_7] : memref<8x512xf32, #tpu.memory_space<vmem>>, vector<8x512xf32>
    tpu.vector_store %arg4[%c0_6, %c0_7], %8 {strides = array<i32>} : memref<8x512xf32, #tpu.memory_space<vmem>>, vector<8x512xf32>,
    return
  }
  func.func @transform_0(%arg0: i32) -> (i32, i32) {
    %c0_i32 = arith.constant 0 : i32
    %c0_i32_0 = arith.constant 0 : i32
    %c0_i32_1 = arith.constant 0 : i32
    return %c0_i32, %c0_i32_0 : i32, i32
  }
  func.func @transform_1(%arg0: i32) -> (i32, i32) {
    %c0_i32 = arith.constant 0 : i32
    %c0_i32_0 = arith.constant 0 : i32
    %c0_i32_1 = arith.constant 0 : i32
    return %c0_i32, %c0_i32_0 : i32, i32
  }
  func.func @transform_2(%arg0: i32) -> (i32, i32) {
    %c0_i32 = arith.constant 0 : i32
    %c0_i32_0 = arith.constant 0 : i32
    %c0_i32_1 = arith.constant 0 : i32
    return %c0_i32, %c0_i32_0 : i32, i32
  }
  func.func @transform_3(%arg0: i32) -> (i32, i32) {
    %c0_i32 = arith.constant 0 : i32
    %c0_i32_0 = arith.constant 0 : i32
    %c0_i32_1 = arith.constant 0 : i32
    return %c0_i32, %c0_i32_0 : i32, i32
  }
}

</mosaic_0001>

<llo_original>
// kernel: tpu_custom_call.1
$region0: #{tpu_custom_call.1}
  #allocation0 [shape = 'u32[]', space=smem, size = 0x4, offset = 0x4, fixed_abs, tag = 'smem constant byte address 0x4 - core index']
  #allocation1 [shape = 'u32[144,128]{1,0:T(1,128)}', space=vmem, size = 0x12000, scoped, tag = 'internal scratch']
  %s0 = inlined_call_operand.hbm [shape: f32[8,1024], index: 0, kind: input, shape index: {}]
  %s1 = inlined_call_operand.hbm [shape: bf16[1024,512], index: 1, kind: input, shape index: {}]
  %s2 = inlined_call_operand.vmem [shape: f32[1,512], index: 2, kind: input, shape index: {}]
  %s3 = inlined_call_operand.hbm [shape: f32[8,512], index: 3, kind: output, shape index: {}]
  %s4 = sld [smem:[#allocation0]]
  $region30: #{tpu_custom_call.1} parent=0
    _
  %s6 = ssub.s32 1, %s4
  %s7 = scalar_select 0, %s6, %s4
  $region1: #{tpu_custom_call.1} parent=0
    #allocation2 [shape = 'u8[32768]{0}', space=vmem, size = 0x8000, scoped, tag = 'input window, operand 0, single buffered']
    #allocation3 [shape = 's32[1]{0}', space=sflag, size = 0x4, scoped, tag = 'scoped memory for tpu_custom_call.1']
    #allocation4 [shape = 's32[1]{0}', space=sflag, size = 0x4, scoped, tag = 'scoped memory for tpu_custom_call.1']
    #allocation5 [shape = 'u8[1048576]{0}', space=vmem, size = 0x100000, scoped, tag = 'input window, operand 1, single buffered']
    #allocation6 [shape = 's32[1]{0}', space=sflag, size = 0x4, scoped, tag = 'scoped memory for tpu_custom_call.1']
    #allocation7 [shape = 'u8[16384]{0}', space=vmem, size = 0x4000, scoped, tag = 'output window, operand 0, single buffered']
    %8 = vsyncpa [#allocation3], 0
    %9 = vsyncpa [#allocation6], 0
    %10 = vsyncpa [#allocation4], 0
    // Predicated region
    $region2: #{tpu_custom_call.1} parent=1 // pred_check
      _
    $region3: #{tpu_custom_call.1} parent=1 // pred_check_branch
      %12 = sbr.rel (0) target = $region5
    $region4: #{tpu_custom_call.1} parent=1 // pred_region
      %s14 = ssub.s32 1024, 1024
      %15 = vsyncadd [#allocation3], %s14
      %s17 = sshll.u32 [#allocation2], 4
      %s18 = int_to_ptr.vmem [resolvable:$true] %s17
      %20 = dma.hbm_to_vmem [thread:$0]  %s0, 1024, %s18, [#allocation3]
    $region5: #{tpu_custom_call.1} parent=1 // pred_fallthru
      _
    // Predicated region
    $region6: #{tpu_custom_call.1} parent=1 // pred_check
      _
    $region7: #{tpu_custom_call.1} parent=1 // pred_check_branch
      %22 = sbr.rel (0) target = $region9
    $region8: #{tpu_custom_call.1} parent=1 // pred_region
      %s24 = ssub.s32 32768, 32768
      %25 = vsyncadd [#allocation6], %s24
      %s26 = sshll.u32 [#allocation5], 4
      %s27 = int_to_ptr.vmem [resolvable:$true] %s26
      %32 = dma.hbm_to_vmem [thread:$0]  %s1, 32768, %s27, [#allocation6], 256, 256, 16
    $region9: #{tpu_custom_call.1} parent=1 // pred_fallthru
      _
    // Predicated region
    $region10: #{tpu_custom_call.1} parent=1 // pred_check
      _
    $region11: #{tpu_custom_call.1} parent=1 // pred_check_branch
      %34 = sbr.rel (0) target = $region13
    $region12: #{tpu_custom_call.1} parent=1 // pred_region
      _
    $region13: #{tpu_custom_call.1} parent=1 // pred_fallthru
      _
    // Predicated region
    $region14: #{tpu_custom_call.1} parent=1 // pred_check
      _
    $region15: #{tpu_custom_call.1} parent=1 // pred_check_branch
      %36 = sbr.rel (0) target = $region17
    $region16: #{tpu_custom_call.1} parent=1 // pred_region
      %37 = dma.done [#allocation3], 1024
    $region17: #{tpu_custom_call.1} parent=1 // pred_fallthru
      _
    // Predicated region
    $region18: #{tpu_custom_call.1} parent=1 // pred_check
      _
    $region19: #{tpu_custom_call.1} parent=1 // pred_check_branch
      %39 = sbr.rel (0) target = $region21
    $region20: #{tpu_custom_call.1} parent=1 // pred_region
      %40 = dma.done [#allocation6], 32768
    $region21: #{tpu_custom_call.1} parent=1 // pred_fallthru
      _
    %v41 = vld [vmem:[#allocation2] sm:$0xff]
    %v42 = vld [vmem:[#allocation2 + $0x8] sm:$0xff]
    %v43 = vld [vmem:[#allocation2 + $0x10] sm:$0xff]
    %v44 = vld [vmem:[#allocation2 + $0x18] sm:$0xff]
    %v45 = vld [vmem:[#allocation2 + $0x20] sm:$0xff]
    %v46 = vld [vmem:[#allocation2 + $0x28] sm:$0xff]
    %v47 = vld [vmem:[#allocation2 + $0x30] sm:$0xff]
    %v48 = vld [vmem:[#allocation2 + $0x38] sm:$0xff]
    %v49 = vpack.c.bf16 %v41, %v41
    %v50 = vpack.c.bf16 %v42, %v42
    %v51 = vpack.c.bf16 %v43, %v43
    %v52 = vpack.c.bf16 %v44, %v44
    %v53 = vpack.c.bf16 %v45, %v45
    %v54 = vpack.c.bf16 %v46, %v46
    %v55 = vpack.c.bf16 %v47, %v47
    %v56 = vpack.c.bf16 %v48, %v48
    %v57 = vld [vmem:[#allocation5] sm:$0xff]
    %v58 = vld [vmem:[#allocation5 + $0x8] sm:$0xff]
    %v59 = vld [vmem:[#allocation5 + $0x10] sm:$0xff]
    %v60 = vld [vmem:[#allocation5 + $0x18] sm:$0xff]
    %v61 = vld [vmem:[#allocation5 + $0x20] sm:$0xff]
    %v62 = vld [vmem:[#allocation5 + $0x28] sm:$0xff]
    %v63 = vld [vmem:[#allocation5 + $0x30] sm:$0xff]
    %v64 = vld [vmem:[#allocation5 + $0x38] sm:$0xff]
    %v65 = vld [vmem:[#allocation5 + $0x40] sm:$0xff]
    %v66 = vld [vmem:[#allocation5 + $0x48] sm:$0xff]
    %v67 = vld [vmem:[#allocation5 + $0x50] sm:$0xff]
    %v68 = vld [vmem:[#allocation5 + $0x58] sm:$0xff]
    %v69 = vld [vmem:[#allocation5 + $0x60] sm:$0xff]
    %v70 = vld [vmem:[#allocation5 + $0x68] sm:$0xff]
    %v71 = vld [vmem:[#allocation5 + $0x70] sm:$0xff]
    %v72 = vld [vmem:[#allocation5 + $0x78] sm:$0xff]
    %v73 = vld [vmem:[#allocation5 + $0x80] sm:$0xff]
    %v74 = vld [vmem:[#allocation5 + $0x88] sm:$0xff]
    %v75 = vld [vmem:[#allocation5 + $0x90] sm:$0xff]
    %v76 = vld [vmem:[#allocation5 + $0x98] sm:$0xff]
    %v77 = vld [vmem:[#allocation5 + $0xa0] sm:$0xff]
    %v78 = vld [vmem:[#allocation5 + $0xa8] sm:$0xff]
    %v79 = vld [vmem:[#allocation5 + $0xb0] sm:$0xff]
    %v80 = vld [vmem:[#allocation5 + $0xb8] sm:$0xff]
    %v81 = vld [vmem:[#allocation5 + $0xc0] sm:$0xff]
    %v82 = vld [vmem:[#allocation5 + $0xc8] sm:$0xff]
    %v83 = vld [vmem:[#allocation5 + $0xd0] sm:$0xff]
    %v84 = vld [vmem:[#allocation5 + $0xd8] sm:$0xff]
    %v85 = vld [vmem:[#allocation5 + $0xe0] sm:$0xff]
    %v86 = vld [vmem:[#allocation5 + $0xe8] sm:$0xff]
    %v87 = vld [vmem:[#allocation5 + $0xf0] sm:$0xff]
    %v88 = vld [vmem:[#allocation5 + $0xf8] sm:$0xff]
    %v89 = vld [vmem:[#allocation5 + $0x100] sm:$0xff]
    %v90 = vld [vmem:[#allocation5 + $0x108] sm:$0xff]
    %v91 = vld [vmem:[#allocation5 + $0x110] sm:$0xff]
    %v92 = vld [vmem:[#allocation5 + $0x118] sm:$0xff]
    %v93 = vld [vmem:[#allocation5 + $0x120] sm:$0xff]
    %v94 = vld [vmem:[#allocation5 + $0x128] sm:$0xff]
    %v95 = vld [vmem:[#allocation5 + $0x130] sm:$0xff]
    %v96 = vld [vmem:[#allocation5 + $0x138] sm:$0xff]
    %v97 = vld [vmem:[#allocation5 + $0x140] sm:$0xff]
    %v98 = vld [vmem:[#allocation5 + $0x148] sm:$0xff]
    %v99 = vld [vmem:[#allocation5 + $0x150] sm:$0xff]
    %v100 = vld [vmem:[#allocation5 + $0x158] sm:$0xff]
    %v101 = vld [vmem:[#allocation5 + $0x160] sm:$0xff]
    %v102 = vld [vmem:[#allocation5 + $0x168] sm:$0xff]
    %v103 = vld [vmem:[#allocation5 + $0x170] sm:$0xff]
    %v104 = vld [vmem:[#allocation5 + $0x178] sm:$0xff]
    %v105 = vld [vmem:[#allocation5 + $0x180] sm:$0xff]
    %v106 = vld [vmem:[#allocation5 + $0x188] sm:$0xff]
    %v107 = vld [vmem:[#allocation5 + $0x190] sm:$0xff]
    %v108 = vld [vmem:[#allocation5 + $0x198] sm:$0xff]
    %v109 = vld [vmem:[#allocation5 + $0x1a0] sm:$0xff]
    %v110 = vld [vmem:[#allocation5 + $0x1a8] sm:$0xff]
    %v111 = vld [vmem:[#allocation5 + $0x1b0] sm:$0xff]
    %v112 = vld [vmem:[#allocation5 + $0x1b8] sm:$0xff]
    %v113 = vld [vmem:[#allocation5 + $0x1c0] sm:$0xff]
    %v114 = vld [vmem:[#allocation5 + $0x1c8] sm:$0xff]
    %v115 = vld [vmem:[#allocation5 + $0x1d0] sm:$0xff]
    %v116 = vld [vmem:[#allocation5 + $0x1d8] sm:$0xff]
    %v117 = vld [vmem:[#allocation5 + $0x1e0] sm:$0xff]
    %v118 = vld [vmem:[#allocation5 + $0x1e8] sm:$0xff]
    %v119 = vld [vmem:[#allocation5 + $0x1f0] sm:$0xff]
    %v120 = vld [vmem:[#allocation5 + $0x1f8] sm:$0xff]
    %v121 = vld [vmem:[#allocation5 + $0x200] sm:$0xff]
    %v122 = vld [vmem:[#allocation5 + $0x208] sm:$0xff]
    %v123 = vld [vmem:[#allocation5 + $0x210] sm:$0xff]
    %v124 = vld [vmem:[#allocation5 + $0x218] sm:$0xff]
    %v125 = vld [vmem:[#allocation5 + $0x220] sm:$0xff]
    %v126 = vld [vmem:[#allocation5 + $0x228] sm:$0xff]
    %v127 = vld [vmem:[#allocation5 + $0x230] sm:$0xff]
    %v128 = vld [vmem:[#allocation5 + $0x238] sm:$0xff]
    %v129 = vld [vmem:[#allocation5 + $0x240] sm:$0xff]
    %v130 = vld [vmem:[#allocation5 + $0x248] sm:$0xff]
    %v131 = vld [vmem:[#allocation5 + $0x250] sm:$0xff]
    %v132 = vld [vmem:[#allocation5 + $0x258] sm:$0xff]
    %v133 = vld [vmem:[#allocation5 + $0x260] sm:$0xff]
    %v134 = vld [vmem:[#allocation5 + $0x268] sm:$0xff]
    %v135 = vld [vmem:[#allocation5 + $0x270] sm:$0xff]
    %v136 = vld [vmem:[#allocation5 + $0x278] sm:$0xff]
    %v137 = vld [vmem:[#allocation5 + $0x280] sm:$0xff]
    %v138 = vld [vmem:[#allocation5 + $0x288] sm:$0xff]
    %v139 = vld [vmem:[#allocation5 + $0x290] sm:$0xff]
    %v140 = vld [vmem:[#allocation5 + $0x298] sm:$0xff]
    %v141 = vld [vmem:[#allocation5 + $0x2a0] sm:$0xff]
    %v142 = vld [vmem:[#allocation5 + $0x2a8] sm:$0xff]
    %v143 = vld [vmem:[#allocation5 + $0x2b0] sm:$0xff]
    %v144 = vld [vmem:[#allocation5 + $0x2b8] sm:$0xff]
    %v145 = vld [vmem:[#allocation5 + $0x2c0] sm:$0xff]
    %v146 = vld [vmem:[#allocation5 + $0x2c8] sm:$0xff]
    %v147 = vld [vmem:[#allocation5 + $0x2d0] sm:$0xff]
    %v148 = vld [vmem:[#allocation5 + $0x2d8] sm:$0xff]
    %v149 = vld [vmem:[#allocation5 + $0x2e0] sm:$0xff]
    %v150 = vld [vmem:[#allocation5 + $0x2e8] sm:$0xff]
    %v151 = vld [vmem:[#allocation5 + $0x2f0] sm:$0xff]
    %v152 = vld [vmem:[#allocation5 + $0x2f8] sm:$0xff]
    %v153 = vld [vmem:[#allocation5 + $0x300] sm:$0xff]
    %v154 = vld [vmem:[#allocation5 + $0x308] sm:$0xff]
    %v155 = vld [vmem:[#allocation5 + $0x310] sm:$0xff]
    %v156 = vld [vmem:[#allocation5 + $0x318] sm:$0xff]
    %v157 = vld [vmem:[#allocation5 + $0x320] sm:$0xff]
    %v158 = vld [vmem:[#allocation5 + $0x328] sm:$0xff]
    %v159 = vld [vmem:[#allocation5 + $0x330] sm:$0xff]
    %v160 = vld [vmem:[#allocation5 + $0x338] sm:$0xff]
    %v161 = vld [vmem:[#allocation5 + $0x340] sm:$0xff]
    %v162 = vld [vmem:[#allocation5 + $0x348] sm:$0xff]
    %v163 = vld [vmem:[#allocation5 + $0x350] sm:$0xff]
    %v164 = vld [vmem:[#allocation5 + $0x358] sm:$0xff]
    %v165 = vld [vmem:[#allocation5 + $0x360] sm:$0xff]
    %v166 = vld [vmem:[#allocation5 + $0x368] sm:$0xff]
    %v167 = vld [vmem:[#allocation5 + $0x370] sm:$0xff]
    %v168 = vld [vmem:[#allocation5 + $0x378] sm:$0xff]
    %v169 = vld [vmem:[#allocation5 + $0x380] sm:$0xff]
    %v170 = vld [vmem:[#allocation5 + $0x388] sm:$0xff]
    %v171 = vld [vmem:[#allocation5 + $0x390] sm:$0xff]
    %v172 = vld [vmem:[#allocation5 + $0x398] sm:$0xff]
    %v173 = vld [vmem:[#allocation5 + $0x3a0] sm:$0xff]
    %v174 = vld [vmem:[#allocation5 + $0x3a8] sm:$0xff]
    %v175 = vld [vmem:[#allocation5 + $0x3b0] sm:$0xff]
    %v176 = vld [vmem:[#allocation5 + $0x3b8] sm:$0xff]
    %v177 = vld [vmem:[#allocation5 + $0x3c0] sm:$0xff]
    %v178 = vld [vmem:[#allocation5 + $0x3c8] sm:$0xff]
    %v179 = vld [vmem:[#allocation5 + $0x3d0] sm:$0xff]
    %v180 = vld [vmem:[#allocation5 + $0x3d8] sm:$0xff]
    %v181 = vld [vmem:[#allocation5 + $0x3e0] sm:$0xff]
    %v182 = vld [vmem:[#allocation5 + $0x3e8] sm:$0xff]
    %v183 = vld [vmem:[#allocation5 + $0x3f0] sm:$0xff]
    %v184 = vld [vmem:[#allocation5 + $0x3f8] sm:$0xff]
    %v185 = vld [vmem:[#allocation5 + $0x400] sm:$0xff]
    %v186 = vld [vmem:[#allocation5 + $0x408] sm:$0xff]
    %v187 = vld [vmem:[#allocation5 + $0x410] sm:$0xff]
    %v188 = vld [vmem:[#allocation5 + $0x418] sm:$0xff]
    %v189 = vld [vmem:[#allocation5 + $0x420] sm:$0xff]
    %v190 = vld [vmem:[#allocation5 + $0x428] sm:$0xff]
    %v191 = vld [vmem:[#allocation5 + $0x430] sm:$0xff]
    %v192 = vld [vmem:[#allocation5 + $0x438] sm:$0xff]
    %v193 = vld [vmem:[#allocation5 + $0x440] sm:$0xff]
    %v194 = vld [vmem:[#allocation5 + $0x448] sm:$0xff]
    %v195 = vld [vmem:[#allocation5 + $0x450] sm:$0xff]
    %v196 = vld [vmem:[#allocation5 + $0x458] sm:$0xff]
    %v197 = vld [vmem:[#allocation5 + $0x460] sm:$0xff]
    %v198 = vld [vmem:[#allocation5 + $0x468] sm:$0xff]
    %v199 = vld [vmem:[#allocation5 + $0x470] sm:$0xff]
    %v200 = vld [vmem:[#allocation5 + $0x478] sm:$0xff]
    %v201 = vld [vmem:[#allocation5 + $0x480] sm:$0xff]
    %v202 = vld [vmem:[#allocation5 + $0x488] sm:$0xff]
    %v203 = vld [vmem:[#allocation5 + $0x490] sm:$0xff]
    %v204 = vld [vmem:[#allocation5 + $0x498] sm:$0xff]
    %v205 = vld [vmem:[#allocation5 + $0x4a0] sm:$0xff]
    %v206 = vld [vmem:[#allocation5 + $0x4a8] sm:$0xff]
    %v207 = vld [vmem:[#allocation5 + $0x4b0] sm:$0xff]
    %v208 = vld [vmem:[#allocation5 + $0x4b8] sm:$0xff]
    %v209 = vld [vmem:[#allocation5 + $0x4c0] sm:$0xff]
    %v210 = vld [vmem:[#allocation5 + $0x4c8] sm:$0xff]
    %v211 = vld [vmem:[#allocation5 + $0x4d0] sm:$0xff]
    %v212 = vld [vmem:[#allocation5 + $0x4d8] sm:$0xff]
    %v213 = vld [vmem:[#allocation5 + $0x4e0] sm:$0xff]
    %v214 = vld [vmem:[#allocation5 + $0x4e8] sm:$0xff]
    %v215 = vld [vmem:[#allocation5 + $0x4f0] sm:$0xff]
    %v216 = vld [vmem:[#allocation5 + $0x4f8] sm:$0xff]
    %v217 = vld [vmem:[#allocation5 + $0x500] sm:$0xff]
    %v218 = vld [vmem:[#allocation5 + $0x508] sm:$0xff]
    %v219 = vld [vmem:[#allocation5 + $0x510] sm:$0xff]
    %v220 = vld [vmem:[#allocation5 + $0x518] sm:$0xff]
    %v221 = vld [vmem:[#allocation5 + $0x520] sm:$0xff]
    %v222 = vld [vmem:[#allocation5 + $0x528] sm:$0xff]
    %v223 = vld [vmem:[#allocation5 + $0x530] sm:$0xff]
    %v224 = vld [vmem:[#allocation5 + $0x538] sm:$0xff]
    %v225 = vld [vmem:[#allocation5 + $0x540] sm:$0xff]
    %v226 = vld [vmem:[#allocation5 + $0x548] sm:$0xff]
    %v227 = vld [vmem:[#allocation5 + $0x550] sm:$0xff]
    %v228 = vld [vmem:[#allocation5 + $0x558] sm:$0xff]
    %v229 = vld [vmem:[#allocation5 + $0x560] sm:$0xff]
    %v230 = vld [vmem:[#allocation5 + $0x568] sm:$0xff]
    %v231 = vld [vmem:[#allocation5 + $0x570] sm:$0xff]
    %v232 = vld [vmem:[#allocation5 + $0x578] sm:$0xff]
    %v233 = vld [vmem:[#allocation5 + $0x580] sm:$0xff]
    %v234 = vld [vmem:[#allocation5 + $0x588] sm:$0xff]
    %v235 = vld [vmem:[#allocation5 + $0x590] sm:$0xff]
    %v236 = vld [vmem:[#allocation5 + $0x598] sm:$0xff]
    %v237 = vld [vmem:[#allocation5 + $0x5a0] sm:$0xff]
    %v238 = vld [vmem:[#allocation5 + $0x5a8] sm:$0xff]
    %v239 = vld [vmem:[#allocation5 + $0x5b0] sm:$0xff]
    %v240 = vld [vmem:[#allocation5 + $0x5b8] sm:$0xff]
    %v241 = vld [vmem:[#allocation5 + $0x5c0] sm:$0xff]
    %v242 = vld [vmem:[#allocation5 + $0x5c8] sm:$0xff]
    %v243 = vld [vmem:[#allocation5 + $0x5d0] sm:$0xff]
    %v244 = vld [vmem:[#allocation5 + $0x5d8] sm:$0xff]
    %v245 = vld [vmem:[#allocation5 + $0x5e0] sm:$0xff]
    %v246 = vld [vmem:[#allocation5 + $0x5e8] sm:$0xff]
    %v247 = vld [vmem:[#allocation5 + $0x5f0] sm:$0xff]
    %v248 = vld [vmem:[#allocation5 + $0x5f8] sm:$0xff]
    %v249 = vld [vmem:[#allocation5 + $0x600] sm:$0xff]
    %v250 = vld [vmem:[#allocation5 + $0x608] sm:$0xff]
    %v251 = vld [vmem:[#allocation5 + $0x610] sm:$0xff]
    %v252 = vld [vmem:[#allocation5 + $0x618] sm:$0xff]
    %v253 = vld [vmem:[#allocation5 + $0x620] sm:$0xff]
    %v254 = vld [vmem:[#allocation5 + $0x628] sm:$0xff]
    %v255 = vld [vmem:[#allocation5 + $0x630] sm:$0xff]
    %v256 = vld [vmem:[#allocation5 + $0x638] sm:$0xff]
    %v257 = vld [vmem:[#allocation5 + $0x640] sm:$0xff]
    %v258 = vld [vmem:[#allocation5 + $0x648] sm:$0xff]
    %v259 = vld [vmem:[#allocation5 + $0x650] sm:$0xff]
    %v260 = vld [vmem:[#allocation5 + $0x658] sm:$0xff]
    %v261 = vld [vmem:[#allocation5 + $0x660] sm:$0xff]
    %v262 = vld [vmem:[#allocation5 + $0x668] sm:$0xff]
    %v263 = vld [vmem:[#allocation5 + $0x670] sm:$0xff]
    %v264 = vld [vmem:[#allocation5 + $0x678] sm:$0xff]
    %v265 = vld [vmem:[#allocation5 + $0x680] sm:$0xff]
    %v266 = vld [vmem:[#allocation5 + $0x688] sm:$0xff]
    %v267 = vld [vmem:[#allocation5 + $0x690] sm:$0xff]
    %v268 = vld [vmem:[#allocation5 + $0x698] sm:$0xff]
    %v269 = vld [vmem:[#allocation5 + $0x6a0] sm:$0xff]
    %v270 = vld [vmem:[#allocation5 + $0x6a8] sm:$0xff]
    %v271 = vld [vmem:[#allocation5 + $0x6b0] sm:$0xff]
    %v272 = vld [vmem:[#allocation5 + $0x6b8] sm:$0xff]
    %v273 = vld [vmem:[#allocation5 + $0x6c0] sm:$0xff]
    %v274 = vld [vmem:[#allocation5 + $0x6c8] sm:$0xff]
    %v275 = vld [vmem:[#allocation5 + $0x6d0] sm:$0xff]
    %v276 = vld [vmem:[#allocation5 + $0x6d8] sm:$0xff]
    %v277 = vld [vmem:[#allocation5 + $0x6e0] sm:$0xff]
    %v278 = vld [vmem:[#allocation5 + $0x6e8] sm:$0xff]
    %v279 = vld [vmem:[#allocation5 + $0x6f0] sm:$0xff]
    %v280 = vld [vmem:[#allocation5 + $0x6f8] sm:$0xff]
    %v281 = vld [vmem:[#allocation5 + $0x700] sm:$0xff]
    %v282 = vld [vmem:[#allocation5 + $0x708] sm:$0xff]
    %v283 = vld [vmem:[#allocation5 + $0x710] sm:$0xff]
    %v284 = vld [vmem:[#allocation5 + $0x718] sm:$0xff]
    %v285 = vld [vmem:[#allocation5 + $0x720] sm:$0xff]
    %v286 = vld [vmem:[#allocation5 + $0x728] sm:$0xff]
    %v287 = vld [vmem:[#allocation5 + $0x730] sm:$0xff]
    %v288 = vld [vmem:[#allocation5 + $0x738] sm:$0xff]
    %v289 = vld [vmem:[#allocation5 + $0x740] sm:$0xff]
    %v290 = vld [vmem:[#allocation5 + $0x748] sm:$0xff]
    %v291 = vld [vmem:[#allocation5 + $0x750] sm:$0xff]
    %v292 = vld [vmem:[#allocation5 + $0x758] sm:$0xff]
    %v293 = vld [vmem:[#allocation5 + $0x760] sm:$0xff]
    %v294 = vld [vmem:[#allocation5 + $0x768] sm:$0xff]
    %v295 = vld [vmem:[#allocation5 + $0x770] sm:$0xff]
    %v296 = vld [vmem:[#allocation5 + $0x778] sm:$0xff]
    %v297 = vld [vmem:[#allocation5 + $0x780] sm:$0xff]
    %v298 = vld [vmem:[#allocation5 + $0x788] sm:$0xff]
    %v299 = vld [vmem:[#allocation5 + $0x790] sm:$0xff]
    %v300 = vld [vmem:[#allocation5 + $0x798] sm:$0xff]
    %v301 = vld [vmem:[#allocation5 + $0x7a0] sm:$0xff]
    %v302 = vld [vmem:[#allocation5 + $0x7a8] sm:$0xff]
    %v303 = vld [vmem:[#allocation5 + $0x7b0] sm:$0xff]
    %v304 = vld [vmem:[#allocation5 + $0x7b8] sm:$0xff]
    %v305 = vld [vmem:[#allocation5 + $0x7c0] sm:$0xff]
    %v306 = vld [vmem:[#allocation5 + $0x7c8] sm:$0xff]
    %v307 = vld [vmem:[#allocation5 + $0x7d0] sm:$0xff]
    %v308 = vld [vmem:[#allocation5 + $0x7d8] sm:$0xff]
    %v309 = vld [vmem:[#allocation5 + $0x7e0] sm:$0xff]
    %v310 = vld [vmem:[#allocation5 + $0x7e8] sm:$0xff]
    %v311 = vld [vmem:[#allocation5 + $0x7f0] sm:$0xff]
    %v312 = vld [vmem:[#allocation5 + $0x7f8] sm:$0xff]
    %v313 = vld [vmem:[%s2] sm:$0xf]
    %v315 = vlaneseq
    %v316 = vshrl.u32 %v315, 7
    %v317 = vsub.s32 0, %v316
    %v318 = vrot.slane %v313, %v317
    %v319 = vlaneseq
    %v320 = vshrl.u32 %v319, 7
    %v321 = vsub.s32 1, %v320
    %v322 = vrot.slane %v313, %v321
    %v323 = vlaneseq
    %v324 = vshrl.u32 %v323, 7
    %v325 = vsub.s32 2, %v324
    %v326 = vrot.slane %v313, %v325
    %v327 = vlaneseq
    %v328 = vshrl.u32 %v327, 7
    %v329 = vsub.s32 3, %v328
    %v330 = vrot.slane %v313, %v329
    %v591 = vunpack.c.l.b16 %v57
    %v592 = vunpack.c.h.b16 %v57
    %v593 = vunpack.c.l.b16 %v58
    %v594 = vunpack.c.h.b16 %v58
    %v595 = vunpack.c.l.b16 %v59
    %v596 = vunpack.c.h.b16 %v59
    %v597 = vunpack.c.l.b16 %v60
    %v598 = vunpack.c.h.b16 %v60
    %v599 = vunpack.c.l.b16 %v61
    %v600 = vunpack.c.h.b16 %v61
    %v601 = vunpack.c.l.b16 %v62
    %v602 = vunpack.c.h.b16 %v62
    %v603 = vunpack.c.l.b16 %v63
    %v604 = vunpack.c.h.b16 %v63
    %v605 = vunpack.c.l.b16 %v64
    %v606 = vunpack.c.h.b16 %v64
    %v607 = vunpack.c.l.b16 %v65
    %v608 = vunpack.c.h.b16 %v65
    %v609 = vunpack.c.l.b16 %v66
    %v610 = vunpack.c.h.b16 %v66
    %v611 = vunpack.c.l.b16 %v67
    %v612 = vunpack.c.h.b16 %v67
    %v613 = vunpack.c.l.b16 %v68
    %v614 = vunpack.c.h.b16 %v68
    %v615 = vunpack.c.l.b16 %v69
    %v616 = vunpack.c.h.b16 %v69
    %v617 = vunpack.c.l.b16 %v70
    %v618 = vunpack.c.h.b16 %v70
    %v619 = vunpack.c.l.b16 %v71
    %v620 = vunpack.c.h.b16 %v71
    %v621 = vunpack.c.l.b16 %v72
    %v622 = vunpack.c.h.b16 %v72
    %v623 = vunpack.c.l.b16 %v73
    %v624 = vunpack.c.h.b16 %v73
    %v625 = vunpack.c.l.b16 %v74
    %v626 = vunpack.c.h.b16 %v74
    %v627 = vunpack.c.l.b16 %v75
    %v628 = vunpack.c.h.b16 %v75
    %v629 = vunpack.c.l.b16 %v76
    %v630 = vunpack.c.h.b16 %v76
    %v631 = vunpack.c.l.b16 %v77
    %v632 = vunpack.c.h.b16 %v77
    %v633 = vunpack.c.l.b16 %v78
    %v634 = vunpack.c.h.b16 %v78
    %v635 = vunpack.c.l.b16 %v79
    %v636 = vunpack.c.h.b16 %v79
    %v637 = vunpack.c.l.b16 %v80
    %v638 = vunpack.c.h.b16 %v80
    %v639 = vunpack.c.l.b16 %v81
    %v640 = vunpack.c.h.b16 %v81
    %v641 = vunpack.c.l.b16 %v82
    %v642 = vunpack.c.h.b16 %v82
    %v643 = vunpack.c.l.b16 %v83
    %v644 = vunpack.c.h.b16 %v83
    %v645 = vunpack.c.l.b16 %v84
    %v646 = vunpack.c.h.b16 %v84
    %v647 = vunpack.c.l.b16 %v85
    %v648 = vunpack.c.h.b16 %v85
    %v649 = vunpack.c.l.b16 %v86
    %v650 = vunpack.c.h.b16 %v86
    %v651 = vunpack.c.l.b16 %v87
    %v652 = vunpack.c.h.b16 %v87
    %v653 = vunpack.c.l.b16 %v88
    %v654 = vunpack.c.h.b16 %v88
    %v655 = vunpack.c.l.b16 %v89
    %v656 = vunpack.c.h.b16 %v89
    %v657 = vunpack.c.l.b16 %v90
    %v658 = vunpack.c.h.b16 %v90
    %v659 = vunpack.c.l.b16 %v91
    %v660 = vunpack.c.h.b16 %v91
    %v661 = vunpack.c.l.b16 %v92
    %v662 = vunpack.c.h.b16 %v92
    %v663 = vunpack.c.l.b16 %v93
    %v664 = vunpack.c.h.b16 %v93
    %v665 = vunpack.c.l.b16 %v94
    %v666 = vunpack.c.h.b16 %v94
    %v667 = vunpack.c.l.b16 %v95
    %v668 = vunpack.c.h.b16 %v95
    %v669 = vunpack.c.l.b16 %v96
    %v670 = vunpack.c.h.b16 %v96
    %v671 = vunpack.c.l.b16 %v97
    %v672 = vunpack.c.h.b16 %v97
    %v673 = vunpack.c.l.b16 %v98
    %v674 = vunpack.c.h.b16 %v98
    %v675 = vunpack.c.l.b16 %v99
    %v676 = vunpack.c.h.b16 %v99
    %v677 = vunpack.c.l.b16 %v100
    %v678 = vunpack.c.h.b16 %v100
    %v679 = vunpack.c.l.b16 %v101
    %v680 = vunpack.c.h.b16 %v101
    %v681 = vunpack.c.l.b16 %v102
    %v682 = vunpack.c.h.b16 %v102
    %v683 = vunpack.c.l.b16 %v103
    %v684 = vunpack.c.h.b16 %v103
    %v685 = vunpack.c.l.b16 %v104
    %v686 = vunpack.c.h.b16 %v104
    %v687 = vunpack.c.l.b16 %v105
    %v688 = vunpack.c.h.b16 %v105
    %v689 = vunpack.c.l.b16 %v106
    %v690 = vunpack.c.h.b16 %v106
    %v691 = vunpack.c.l.b16 %v107
    %v692 = vunpack.c.h.b16 %v107
    %v693 = vunpack.c.l.b16 %v108
    %v694 = vunpack.c.h.b16 %v108
    %v695 = vunpack.c.l.b16 %v109
    %v696 = vunpack.c.h.b16 %v109
    %v697 = vunpack.c.l.b16 %v110
    %v698 = vunpack.c.h.b16 %v110
    %v699 = vunpack.c.l.b16 %v111
    %v700 = vunpack.c.h.b16 %v111
    %v701 = vunpack.c.l.b16 %v112
    %v702 = vunpack.c.h.b16 %v112
    %v703 = vunpack.c.l.b16 %v113
    %v704 = vunpack.c.h.b16 %v113
    %v705 = vunpack.c.l.b16 %v114
    %v706 = vunpack.c.h.b16 %v114
    %v707 = vunpack.c.l.b16 %v115
    %v708 = vunpack.c.h.b16 %v115
    %v709 = vunpack.c.l.b16 %v116
    %v710 = vunpack.c.h.b16 %v116
    %v711 = vunpack.c.l.b16 %v117
    %v712 = vunpack.c.h.b16 %v117
    %v713 = vunpack.c.l.b16 %v118
    %v714 = vunpack.c.h.b16 %v118
    %v715 = vunpack.c.l.b16 %v119
    %v716 = vunpack.c.h.b16 %v119
    %v717 = vunpack.c.l.b16 %v120
    %v718 = vunpack.c.h.b16 %v120
    %v719 = vunpack.c.l.b16 %v121
    %v720 = vunpack.c.h.b16 %v121
    %v721 = vunpack.c.l.b16 %v122
    %v722 = vunpack.c.h.b16 %v122
    %v723 = vunpack.c.l.b16 %v123
    %v724 = vunpack.c.h.b16 %v123
    %v725 = vunpack.c.l.b16 %v124
    %v726 = vunpack.c.h.b16 %v124
    %v727 = vunpack.c.l.b16 %v125
    %v728 = vunpack.c.h.b16 %v125
    %v729 = vunpack.c.l.b16 %v126
    %v730 = vunpack.c.h.b16 %v126
    %v731 = vunpack.c.l.b16 %v127
    %v732 = vunpack.c.h.b16 %v127
    %v733 = vunpack.c.l.b16 %v128
    %v734 = vunpack.c.h.b16 %v128
    %v735 = vunpack.c.l.b16 %v129
    %v736 = vunpack.c.h.b16 %v129
    %v737 = vunpack.c.l.b16 %v130
    %v738 = vunpack.c.h.b16 %v130
    %v739 = vunpack.c.l.b16 %v131
    %v740 = vunpack.c.h.b16 %v131
    %v741 = vunpack.c.l.b16 %v132
    %v742 = vunpack.c.h.b16 %v132
    %v743 = vunpack.c.l.b16 %v133
    %v744 = vunpack.c.h.b16 %v133
    %v745 = vunpack.c.l.b16 %v134
    %v746 = vunpack.c.h.b16 %v134
    %v747 = vunpack.c.l.b16 %v135
    %v748 = vunpack.c.h.b16 %v135
    %v749 = vunpack.c.l.b16 %v136
    %v750 = vunpack.c.h.b16 %v136
    %v751 = vunpack.c.l.b16 %v137
    %v752 = vunpack.c.h.b16 %v137
    %v753 = vunpack.c.l.b16 %v138
    %v754 = vunpack.c.h.b16 %v138
    %v755 = vunpack.c.l.b16 %v139
    %v756 = vunpack.c.h.b16 %v139
    %v757 = vunpack.c.l.b16 %v140
    %v758 = vunpack.c.h.b16 %v140
    %v759 = vunpack.c.l.b16 %v141
    %v760 = vunpack.c.h.b16 %v141
    %v761 = vunpack.c.l.b16 %v142
    %v762 = vunpack.c.h.b16 %v142
    %v763 = vunpack.c.l.b16 %v143
    %v764 = vunpack.c.h.b16 %v143
    %v765 = vunpack.c.l.b16 %v144
    %v766 = vunpack.c.h.b16 %v144
    %v767 = vunpack.c.l.b16 %v145
    %v768 = vunpack.c.h.b16 %v145
    %v769 = vunpack.c.l.b16 %v146
    %v770 = vunpack.c.h.b16 %v146
    %v771 = vunpack.c.l.b16 %v147
    %v772 = vunpack.c.h.b16 %v147
    %v773 = vunpack.c.l.b16 %v148
    %v774 = vunpack.c.h.b16 %v148
    %v775 = vunpack.c.l.b16 %v149
    %v776 = vunpack.c.h.b16 %v149
    %v777 = vunpack.c.l.b16 %v150
    %v778 = vunpack.c.h.b16 %v150
    %v779 = vunpack.c.l.b16 %v151
    %v780 = vunpack.c.h.b16 %v151
    %v781 = vunpack.c.l.b16 %v152
    %v782 = vunpack.c.h.b16 %v152
    %v783 = vunpack.c.l.b16 %v153
    %v784 = vunpack.c.h.b16 %v153
    %v785 = vunpack.c.l.b16 %v154
    %v786 = vunpack.c.h.b16 %v154
    %v787 = vunpack.c.l.b16 %v155
    %v788 = vunpack.c.h.b16 %v155
    %v789 = vunpack.c.l.b16 %v156
    %v790 = vunpack.c.h.b16 %v156
    %v791 = vunpack.c.l.b16 %v157
    %v792 = vunpack.c.h.b16 %v157
    %v793 = vunpack.c.l.b16 %v158
    %v794 = vunpack.c.h.b16 %v158
    %v795 = vunpack.c.l.b16 %v159
    %v796 = vunpack.c.h.b16 %v159
    %v797 = vunpack.c.l.b16 %v160
    %v798 = vunpack.c.h.b16 %v160
    %v799 = vunpack.c.l.b16 %v161
    %v800 = vunpack.c.h.b16 %v161
    %v801 = vunpack.c.l.b16 %v162
    %v802 = vunpack.c.h.b16 %v162
    %v803 = vunpack.c.l.b16 %v163
    %v804 = vunpack.c.h.b16 %v163
    %v805 = vunpack.c.l.b16 %v164
    %v806 = vunpack.c.h.b16 %v164
    %v807 = vunpack.c.l.b16 %v165
    %v808 = vunpack.c.h.b16 %v165
    %v809 = vunpack.c.l.b16 %v166
    %v810 = vunpack.c.h.b16 %v166
    %v811 = vunpack.c.l.b16 %v167
    %v812 = vunpack.c.h.b16 %v167
    %v813 = vunpack.c.l.b16 %v168
    %v814 = vunpack.c.h.b16 %v168
    %v815 = vunpack.c.l.b16 %v169
    %v816 = vunpack.c.h.b16 %v169
    %v817 = vunpack.c.l.b16 %v170
    %v818 = vunpack.c.h.b16 %v170
    %v819 = vunpack.c.l.b16 %v171
    %v820 = vunpack.c.h.b16 %v171
    %v821 = vunpack.c.l.b16 %v172
    %v822 = vunpack.c.h.b16 %v172
    %v823 = vunpack.c.l.b16 %v173
    %v824 = vunpack.c.h.b16 %v173
    %v825 = vunpack.c.l.b16 %v174
    %v826 = vunpack.c.h.b16 %v174
    %v827 = vunpack.c.l.b16 %v175
    %v828 = vunpack.c.h.b16 %v175
    %v829 = vunpack.c.l.b16 %v176
    %v830 = vunpack.c.h.b16 %v176
    %v831 = vunpack.c.l.b16 %v177
    %v832 = vunpack.c.h.b16 %v177
    %v833 = vunpack.c.l.b16 %v178
    %v834 = vunpack.c.h.b16 %v178
    %v835 = vunpack.c.l.b16 %v179
    %v836 = vunpack.c.h.b16 %v179
    %v837 = vunpack.c.l.b16 %v180
    %v838 = vunpack.c.h.b16 %v180
    %v839 = vunpack.c.l.b16 %v181
    %v840 = vunpack.c.h.b16 %v181
    %v841 = vunpack.c.l.b16 %v182
    %v842 = vunpack.c.h.b16 %v182
    %v843 = vunpack.c.l.b16 %v183
    %v844 = vunpack.c.h.b16 %v183
    %v845 = vunpack.c.l.b16 %v184
    %v846 = vunpack.c.h.b16 %v184
    %v847 = vunpack.c.l.b16 %v185
    %v848 = vunpack.c.h.b16 %v185
    %v849 = vunpack.c.l.b16 %v186
    %v850 = vunpack.c.h.b16 %v186
    %v851 = vunpack.c.l.b16 %v187
    %v852 = vunpack.c.h.b16 %v187
    %v853 = vunpack.c.l.b16 %v188
    %v854 = vunpack.c.h.b16 %v188
    %v855 = vunpack.c.l.b16 %v189
    %v856 = vunpack.c.h.b16 %v189
    %v857 = vunpack.c.l.b16 %v190
    %v858 = vunpack.c.h.b16 %v190
    %v859 = vunpack.c.l.b16 %v191
    %v860 = vunpack.c.h.b16 %v191
    %v861 = vunpack.c.l.b16 %v192
    %v862 = vunpack.c.h.b16 %v192
    %v863 = vunpack.c.l.b16 %v193
    %v864 = vunpack.c.h.b16 %v193
    %v865 = vunpack.c.l.b16 %v194
    %v866 = vunpack.c.h.b16 %v194
    %v867 = vunpack.c.l.b16 %v195
    %v868 = vunpack.c.h.b16 %v195
    %v869 = vunpack.c.l.b16 %v196
    %v870 = vunpack.c.h.b16 %v196
    %v871 = vunpack.c.l.b16 %v197
    %v872 = vunpack.c.h.b16 %v197
    %v873 = vunpack.c.l.b16 %v198
    %v874 = vunpack.c.h.b16 %v198
    %v875 = vunpack.c.l.b16 %v199
    %v876 = vunpack.c.h.b16 %v199
    %v877 = vunpack.c.l.b16 %v200
    %v878 = vunpack.c.h.b16 %v200
    %v879 = vunpack.c.l.b16 %v201
    %v880 = vunpack.c.h.b16 %v201
    %v881 = vunpack.c.l.b16 %v202
    %v882 = vunpack.c.h.b16 %v202
    %v883 = vunpack.c.l.b16 %v203
    %v884 = vunpack.c.h.b16 %v203
    %v885 = vunpack.c.l.b16 %v204
    %v886 = vunpack.c.h.b16 %v204
    %v887 = vunpack.c.l.b16 %v205
    %v888 = vunpack.c.h.b16 %v205
    %v889 = vunpack.c.l.b16 %v206
    %v890 = vunpack.c.h.b16 %v206
    %v891 = vunpack.c.l.b16 %v207
    %v892 = vunpack.c.h.b16 %v207
    %v893 = vunpack.c.l.b16 %v208
    %v894 = vunpack.c.h.b16 %v208
    %v895 = vunpack.c.l.b16 %v209
    %v896 = vunpack.c.h.b16 %v209
    %v897 = vunpack.c.l.b16 %v210
    %v898 = vunpack.c.h.b16 %v210
    %v899 = vunpack.c.l.b16 %v211
    %v900 = vunpack.c.h.b16 %v211
    %v901 = vunpack.c.l.b16 %v212
    %v902 = vunpack.c.h.b16 %v212
    %v903 = vunpack.c.l.b16 %v213
    %v904 = vunpack.c.h.b16 %v213
    %v905 = vunpack.c.l.b16 %v214
    %v906 = vunpack.c.h.b16 %v214
    %v907 = vunpack.c.l.b16 %v215
    %v908 = vunpack.c.h.b16 %v215
    %v909 = vunpack.c.l.b16 %v216
    %v910 = vunpack.c.h.b16 %v216
    %v911 = vunpack.c.l.b16 %v217
    %v912 = vunpack.c.h.b16 %v217
    %v913 = vunpack.c.l.b16 %v218
    %v914 = vunpack.c.h.b16 %v218
    %v915 = vunpack.c.l.b16 %v219
    %v916 = vunpack.c.h.b16 %v219
    %v917 = vunpack.c.l.b16 %v220
    %v918 = vunpack.c.h.b16 %v220
    %v919 = vunpack.c.l.b16 %v221
    %v920 = vunpack.c.h.b16 %v221
    %v921 = vunpack.c.l.b16 %v222
    %v922 = vunpack.c.h.b16 %v222
    %v923 = vunpack.c.l.b16 %v223
    %v924 = vunpack.c.h.b16 %v223
    %v925 = vunpack.c.l.b16 %v224
    %v926 = vunpack.c.h.b16 %v224
    %v927 = vunpack.c.l.b16 %v225
    %v928 = vunpack.c.h.b16 %v225
    %v929 = vunpack.c.l.b16 %v226
    %v930 = vunpack.c.h.b16 %v226
    %v931 = vunpack.c.l.b16 %v227
    %v932 = vunpack.c.h.b16 %v227
    %v933 = vunpack.c.l.b16 %v228
    %v934 = vunpack.c.h.b16 %v228
    %v935 = vunpack.c.l.b16 %v229
    %v936 = vunpack.c.h.b16 %v229
    %v937 = vunpack.c.l.b16 %v230
    %v938 = vunpack.c.h.b16 %v230
    %v939 = vunpack.c.l.b16 %v231
    %v940 = vunpack.c.h.b16 %v231
    %v941 = vunpack.c.l.b16 %v232
    %v942 = vunpack.c.h.b16 %v232
    %v943 = vunpack.c.l.b16 %v233
    %v944 = vunpack.c.h.b16 %v233
    %v945 = vunpack.c.l.b16 %v234
    %v946 = vunpack.c.h.b16 %v234
    %v947 = vunpack.c.l.b16 %v235
    %v948 = vunpack.c.h.b16 %v235
    %v949 = vunpack.c.l.b16 %v236
    %v950 = vunpack.c.h.b16 %v236
    %v951 = vunpack.c.l.b16 %v237
    %v952 = vunpack.c.h.b16 %v237
    %v953 = vunpack.c.l.b16 %v238
    %v954 = vunpack.c.h.b16 %v238
    %v955 = vunpack.c.l.b16 %v239
    %v956 = vunpack.c.h.b16 %v239
    %v957 = vunpack.c.l.b16 %v240
    %v958 = vunpack.c.h.b16 %v240
    %v959 = vunpack.c.l.b16 %v241
    %v960 = vunpack.c.h.b16 %v241
    %v961 = vunpack.c.l.b16 %v242
    %v962 = vunpack.c.h.b16 %v242
    %v963 = vunpack.c.l.b16 %v243
    %v964 = vunpack.c.h.b16 %v243
    %v965 = vunpack.c.l.b16 %v244
    %v966 = vunpack.c.h.b16 %v244
    %v967 = vunpack.c.l.b16 %v245
    %v968 = vunpack.c.h.b16 %v245
    %v969 = vunpack.c.l.b16 %v246
    %v970 = vunpack.c.h.b16 %v246
    %v971 = vunpack.c.l.b16 %v247
    %v972 = vunpack.c.h.b16 %v247
    %v973 = vunpack.c.l.b16 %v248
    %v974 = vunpack.c.h.b16 %v248
    %v975 = vunpack.c.l.b16 %v249
    %v976 = vunpack.c.h.b16 %v249
    %v977 = vunpack.c.l.b16 %v250
    %v978 = vunpack.c.h.b16 %v250
    %v979 = vunpack.c.l.b16 %v251
    %v980 = vunpack.c.h.b16 %v251
    %v981 = vunpack.c.l.b16 %v252
    %v982 = vunpack.c.h.b16 %v252
    %v983 = vunpack.c.l.b16 %v253
    %v984 = vunpack.c.h.b16 %v253
    %v985 = vunpack.c.l.b16 %v254
    %v986 = vunpack.c.h.b16 %v254
    %v987 = vunpack.c.l.b16 %v255
    %v988 = vunpack.c.h.b16 %v255
    %v989 = vunpack.c.l.b16 %v256
    %v990 = vunpack.c.h.b16 %v256
    %v991 = vunpack.c.l.b16 %v257
    %v992 = vunpack.c.h.b16 %v257
    %v993 = vunpack.c.l.b16 %v258
    %v994 = vunpack.c.h.b16 %v258
    %v995 = vunpack.c.l.b16 %v259
    %v996 = vunpack.c.h.b16 %v259
    %v997 = vunpack.c.l.b16 %v260
    %v998 = vunpack.c.h.b16 %v260
    %v999 = vunpack.c.l.b16 %v261
    %v1000 = vunpack.c.h.b16 %v261
    %v1001 = vunpack.c.l.b16 %v262
    %v1002 = vunpack.c.h.b16 %v262
    %v1003 = vunpack.c.l.b16 %v263
    %v1004 = vunpack.c.h.b16 %v263
    %v1005 = vunpack.c.l.b16 %v264
    %v1006 = vunpack.c.h.b16 %v264
    %v1007 = vunpack.c.l.b16 %v265
    %v1008 = vunpack.c.h.b16 %v265
    %v1009 = vunpack.c.l.b16 %v266
    %v1010 = vunpack.c.h.b16 %v266
    %v1011 = vunpack.c.l.b16 %v267
    %v1012 = vunpack.c.h.b16 %v267
    %v1013 = vunpack.c.l.b16 %v268
    %v1014 = vunpack.c.h.b16 %v268
    %v1015 = vunpack.c.l.b16 %v269
    %v1016 = vunpack.c.h.b16 %v269
    %v1017 = vunpack.c.l.b16 %v270
    %v1018 = vunpack.c.h.b16 %v270
    %v1019 = vunpack.c.l.b16 %v271
    %v1020 = vunpack.c.h.b16 %v271
    %v1021 = vunpack.c.l.b16 %v272
    %v1022 = vunpack.c.h.b16 %v272
    %v1023 = vunpack.c.l.b16 %v273
    %v1024 = vunpack.c.h.b16 %v273
    %v1025 = vunpack.c.l.b16 %v274
    %v1026 = vunpack.c.h.b16 %v274
    %v1027 = vunpack.c.l.b16 %v275
    %v1028 = vunpack.c.h.b16 %v275
    %v1029 = vunpack.c.l.b16 %v276
    %v1030 = vunpack.c.h.b16 %v276
    %v1031 = vunpack.c.l.b16 %v277
    %v1032 = vunpack.c.h.b16 %v277
    %v1033 = vunpack.c.l.b16 %v278
    %v1034 = vunpack.c.h.b16 %v278
    %v1035 = vunpack.c.l.b16 %v279
    %v1036 = vunpack.c.h.b16 %v279
    %v1037 = vunpack.c.l.b16 %v280
    %v1038 = vunpack.c.h.b16 %v280
    %v1039 = vunpack.c.l.b16 %v281
    %v1040 = vunpack.c.h.b16 %v281
    %v1041 = vunpack.c.l.b16 %v282
    %v1042 = vunpack.c.h.b16 %v282
    %v1043 = vunpack.c.l.b16 %v283
    %v1044 = vunpack.c.h.b16 %v283
    %v1045 = vunpack.c.l.b16 %v284
    %v1046 = vunpack.c.h.b16 %v284
    %v1047 = vunpack.c.l.b16 %v285
    %v1048 = vunpack.c.h.b16 %v285
    %v1049 = vunpack.c.l.b16 %v286
    %v1050 = vunpack.c.h.b16 %v286
    %v1051 = vunpack.c.l.b16 %v287
    %v1052 = vunpack.c.h.b16 %v287
    %v1053 = vunpack.c.l.b16 %v288
    %v1054 = vunpack.c.h.b16 %v288
    %v1055 = vunpack.c.l.b16 %v289
    %v1056 = vunpack.c.h.b16 %v289
    %v1057 = vunpack.c.l.b16 %v290
    %v1058 = vunpack.c.h.b16 %v290
    %v1059 = vunpack.c.l.b16 %v291
    %v1060 = vunpack.c.h.b16 %v291
    %v1061 = vunpack.c.l.b16 %v292
    %v1062 = vunpack.c.h.b16 %v292
    %v1063 = vunpack.c.l.b16 %v293
    %v1064 = vunpack.c.h.b16 %v293
    %v1065 = vunpack.c.l.b16 %v294
    %v1066 = vunpack.c.h.b16 %v294
    %v1067 = vunpack.c.l.b16 %v295
    %v1068 = vunpack.c.h.b16 %v295
    %v1069 = vunpack.c.l.b16 %v296
    %v1070 = vunpack.c.h.b16 %v296
    %v1071 = vunpack.c.l.b16 %v297
    %v1072 = vunpack.c.h.b16 %v297
    %v1073 = vunpack.c.l.b16 %v298
    %v1074 = vunpack.c.h.b16 %v298
    %v1075 = vunpack.c.l.b16 %v299
    %v1076 = vunpack.c.h.b16 %v299
    %v1077 = vunpack.c.l.b16 %v300
    %v1078 = vunpack.c.h.b16 %v300
    %v1079 = vunpack.c.l.b16 %v301
    %v1080 = vunpack.c.h.b16 %v301
    %v1081 = vunpack.c.l.b16 %v302
    %v1082 = vunpack.c.h.b16 %v302
    %v1083 = vunpack.c.l.b16 %v303
    %v1084 = vunpack.c.h.b16 %v303
    %v1085 = vunpack.c.l.b16 %v304
    %v1086 = vunpack.c.h.b16 %v304
    %v1087 = vunpack.c.l.b16 %v305
    %v1088 = vunpack.c.h.b16 %v305
    %v1089 = vunpack.c.l.b16 %v306
    %v1090 = vunpack.c.h.b16 %v306
    %v1091 = vunpack.c.l.b16 %v307
    %v1092 = vunpack.c.h.b16 %v307
    %v1093 = vunpack.c.l.b16 %v308
    %v1094 = vunpack.c.h.b16 %v308
    %v1095 = vunpack.c.l.b16 %v309
    %v1096 = vunpack.c.h.b16 %v309
    %v1097 = vunpack.c.l.b16 %v310
    %v1098 = vunpack.c.h.b16 %v310
    %v1099 = vunpack.c.l.b16 %v311
    %v1100 = vunpack.c.h.b16 %v311
    %v1101 = vunpack.c.l.b16 %v312
    %v1102 = vunpack.c.h.b16 %v312
    %v1103 = vpack.c.b16 %v595, %v591
    %v1104 = vpack.c.b16 %v596, %v592
    %v1105 = vpack.c.b16 %v597, %v593
    %v1106 = vpack.c.b16 %v598, %v594
    %v1107 = vpack.c.b16 %v603, %v599
    %v1108 = vpack.c.b16 %v604, %v600
    %v1109 = vpack.c.b16 %v605, %v601
    %v1110 = vpack.c.b16 %v606, %v602
    %v1111 = vpack.c.b16 %v611, %v607
    %v1112 = vpack.c.b16 %v612, %v608
    %v1113 = vpack.c.b16 %v613, %v609
    %v1114 = vpack.c.b16 %v614, %v610
    %v1115 = vpack.c.b16 %v619, %v615
    %v1116 = vpack.c.b16 %v620, %v616
    %v1117 = vpack.c.b16 %v621, %v617
    %v1118 = vpack.c.b16 %v622, %v618
    %v1119 = vpack.c.b16 %v627, %v623
    %v1120 = vpack.c.b16 %v628, %v624
    %v1121 = vpack.c.b16 %v629, %v625
    %v1122 = vpack.c.b16 %v630, %v626
    %v1123 = vpack.c.b16 %v635, %v631
    %v1124 = vpack.c.b16 %v636, %v632
    %v1125 = vpack.c.b16 %v637, %v633
    %v1126 = vpack.c.b16 %v638, %v634
    %v1127 = vpack.c.b16 %v643, %v639
    %v1128 = vpack.c.b16 %v644, %v640
    %v1129 = vpack.c.b16 %v645, %v641
    %v1130 = vpack.c.b16 %v646, %v642
    %v1131 = vpack.c.b16 %v651, %v647
    %v1132 = vpack.c.b16 %v652, %v648
    %v1133 = vpack.c.b16 %v653, %v649
    %v1134 = vpack.c.b16 %v654, %v650
    %v1135 = vpack.c.b16 %v659, %v655
    %v1136 = vpack.c.b16 %v660, %v656
    %v1137 = vpack.c.b16 %v661, %v657
    %v1138 = vpack.c.b16 %v662, %v658
    %v1139 = vpack.c.b16 %v667, %v663
    %v1140 = vpack.c.b16 %v668, %v664
    %v1141 = vpack.c.b16 %v669, %v665
    %v1142 = vpack.c.b16 %v670, %v666
    %v1143 = vpack.c.b16 %v675, %v671
    %v1144 = vpack.c.b16 %v676, %v672
    %v1145 = vpack.c.b16 %v677, %v673
    %v1146 = vpack.c.b16 %v678, %v674
    %v1147 = vpack.c.b16 %v683, %v679
    %v1148 = vpack.c.b16 %v684, %v680
    %v1149 = vpack.c.b16 %v685, %v681
    %v1150 = vpack.c.b16 %v686, %v682
    %v1151 = vpack.c.b16 %v691, %v687
    %v1152 = vpack.c.b16 %v692, %v688
    %v1153 = vpack.c.b16 %v693, %v689
    %v1154 = vpack.c.b16 %v694, %v690
    %v1155 = vpack.c.b16 %v699, %v695
    %v1156 = vpack.c.b16 %v700, %v696
    %v1157 = vpack.c.b16 %v701, %v697
    %v1158 = vpack.c.b16 %v702, %v698
    %v1159 = vpack.c.b16 %v707, %v703
    %v1160 = vpack.c.b16 %v708, %v704
    %v1161 = vpack.c.b16 %v709, %v705
    %v1162 = vpack.c.b16 %v710, %v706
    %v1163 = vpack.c.b16 %v715, %v711
    %v1164 = vpack.c.b16 %v716, %v712
    %v1165 = vpack.c.b16 %v717, %v713
    %v1166 = vpack.c.b16 %v718, %v714
    %v1167 = vpack.c.b16 %v723, %v719
    %v1168 = vpack.c.b16 %v724, %v720
    %v1169 = vpack.c.b16 %v725, %v721
    %v1170 = vpack.c.b16 %v726, %v722
    %v1171 = vpack.c.b16 %v731, %v727
    %v1172 = vpack.c.b16 %v732, %v728
    %v1173 = vpack.c.b16 %v733, %v729
    %v1174 = vpack.c.b16 %v734, %v730
    %v1175 = vpack.c.b16 %v739, %v735
    %v1176 = vpack.c.b16 %v740, %v736
    %v1177 = vpack.c.b16 %v741, %v737
    %v1178 = vpack.c.b16 %v742, %v738
    %v1179 = vpack.c.b16 %v747, %v743
    %v1180 = vpack.c.b16 %v748, %v744
    %v1181 = vpack.c.b16 %v749, %v745
    %v1182 = vpack.c.b16 %v750, %v746
    %v1183 = vpack.c.b16 %v755, %v751
    %v1184 = vpack.c.b16 %v756, %v752
    %v1185 = vpack.c.b16 %v757, %v753
    %v1186 = vpack.c.b16 %v758, %v754
    %v1187 = vpack.c.b16 %v763, %v759
    %v1188 = vpack.c.b16 %v764, %v760
    %v1189 = vpack.c.b16 %v765, %v761
    %v1190 = vpack.c.b16 %v766, %v762
    %v1191 = vpack.c.b16 %v771, %v767
    %v1192 = vpack.c.b16 %v772, %v768
    %v1193 = vpack.c.b16 %v773, %v769
    %v1194 = vpack.c.b16 %v774, %v770
    %v1195 = vpack.c.b16 %v779, %v775
    %v1196 = vpack.c.b16 %v780, %v776
    %v1197 = vpack.c.b16 %v781, %v777
    %v1198 = vpack.c.b16 %v782, %v778
    %v1199 = vpack.c.b16 %v787, %v783
    %v1200 = vpack.c.b16 %v788, %v784
    %v1201 = vpack.c.b16 %v789, %v785
    %v1202 = vpack.c.b16 %v790, %v786
    %v1203 = vpack.c.b16 %v795, %v791
    %v1204 = vpack.c.b16 %v796, %v792
    %v1205 = vpack.c.b16 %v797, %v793
    %v1206 = vpack.c.b16 %v798, %v794
    %v1207 = vpack.c.b16 %v803, %v799
    %v1208 = vpack.c.b16 %v804, %v800
    %v1209 = vpack.c.b16 %v805, %v801
    %v1210 = vpack.c.b16 %v806, %v802
    %v1211 = vpack.c.b16 %v811, %v807
    %v1212 = vpack.c.b16 %v812, %v808
    %v1213 = vpack.c.b16 %v813, %v809
    %v1214 = vpack.c.b16 %v814, %v810
    %v1215 = vpack.c.b16 %v819, %v815
    %v1216 = vpack.c.b16 %v820, %v816
    %v1217 = vpack.c.b16 %v821, %v817
    %v1218 = vpack.c.b16 %v822, %v818
    %v1219 = vpack.c.b16 %v827, %v823
    %v1220 = vpack.c.b16 %v828, %v824
    %v1221 = vpack.c.b16 %v829, %v825
    %v1222 = vpack.c.b16 %v830, %v826
    %v1223 = vpack.c.b16 %v835, %v831
    %v1224 = vpack.c.b16 %v836, %v832
    %v1225 = vpack.c.b16 %v837, %v833
    %v1226 = vpack.c.b16 %v838, %v834
    %v1227 = vpack.c.b16 %v843, %v839
    %v1228 = vpack.c.b16 %v844, %v840
    %v1229 = vpack.c.b16 %v845, %v841
    %v1230 = vpack.c.b16 %v846, %v842
    %v1231 = vpack.c.b16 %v851, %v847
    %v1232 = vpack.c.b16 %v852, %v848
    %v1233 = vpack.c.b16 %v853, %v849
    %v1234 = vpack.c.b16 %v854, %v850
    %v1235 = vpack.c.b16 %v859, %v855
    %v1236 = vpack.c.b16 %v860, %v856
    %v1237 = vpack.c.b16 %v861, %v857
    %v1238 = vpack.c.b16 %v862, %v858
    %v1239 = vpack.c.b16 %v867, %v863
    %v1240 = vpack.c.b16 %v868, %v864
    %v1241 = vpack.c.b16 %v869, %v865
    %v1242 = vpack.c.b16 %v870, %v866
    %v1243 = vpack.c.b16 %v875, %v871
    %v1244 = vpack.c.b16 %v876, %v872
    %v1245 = vpack.c.b16 %v877, %v873
    %v1246 = vpack.c.b16 %v878, %v874
    %v1247 = vpack.c.b16 %v883, %v879
    %v1248 = vpack.c.b16 %v884, %v880
    %v1249 = vpack.c.b16 %v885, %v881
    %v1250 = vpack.c.b16 %v886, %v882
    %v1251 = vpack.c.b16 %v891, %v887
    %v1252 = vpack.c.b16 %v892, %v888
    %v1253 = vpack.c.b16 %v893, %v889
    %v1254 = vpack.c.b16 %v894, %v890
    %v1255 = vpack.c.b16 %v899, %v895
    %v1256 = vpack.c.b16 %v900, %v896
    %v1257 = vpack.c.b16 %v901, %v897
    %v1258 = vpack.c.b16 %v902, %v898
    %v1259 = vpack.c.b16 %v907, %v903
    %v1260 = vpack.c.b16 %v908, %v904
    %v1261 = vpack.c.b16 %v909, %v905
    %v1262 = vpack.c.b16 %v910, %v906
    %v1263 = vpack.c.b16 %v915, %v911
    %v1264 = vpack.c.b16 %v916, %v912
    %v1265 = vpack.c.b16 %v917, %v913
    %v1266 = vpack.c.b16 %v918, %v914
    %v1267 = vpack.c.b16 %v923, %v919
    %v1268 = vpack.c.b16 %v924, %v920
    %v1269 = vpack.c.b16 %v925, %v921
    %v1270 = vpack.c.b16 %v926, %v922
    %v1271 = vpack.c.b16 %v931, %v927
    %v1272 = vpack.c.b16 %v932, %v928
    %v1273 = vpack.c.b16 %v933, %v929
    %v1274 = vpack.c.b16 %v934, %v930
    %v1275 = vpack.c.b16 %v939, %v935
    %v1276 = vpack.c.b16 %v940, %v936
    %v1277 = vpack.c.b16 %v941, %v937
    %v1278 = vpack.c.b16 %v942, %v938
    %v1279 = vpack.c.b16 %v947, %v943
    %v1280 = vpack.c.b16 %v948, %v944
    %v1281 = vpack.c.b16 %v949, %v945
    %v1282 = vpack.c.b16 %v950, %v946
    %v1283 = vpack.c.b16 %v955, %v951
    %v1284 = vpack.c.b16 %v956, %v952
    %v1285 = vpack.c.b16 %v957, %v953
    %v1286 = vpack.c.b16 %v958, %v954
    %v1287 = vpack.c.b16 %v963, %v959
    %v1288 = vpack.c.b16 %v964, %v960
    %v1289 = vpack.c.b16 %v965, %v961
    %v1290 = vpack.c.b16 %v966, %v962
    %v1291 = vpack.c.b16 %v971, %v967
    %v1292 = vpack.c.b16 %v972, %v968
    %v1293 = vpack.c.b16 %v973, %v969
    %v1294 = vpack.c.b16 %v974, %v970
    %v1295 = vpack.c.b16 %v979, %v975
    %v1296 = vpack.c.b16 %v980, %v976
    %v1297 = vpack.c.b16 %v981, %v977
    %v1298 = vpack.c.b16 %v982, %v978
    %v1299 = vpack.c.b16 %v987, %v983
    %v1300 = vpack.c.b16 %v988, %v984
    %v1301 = vpack.c.b16 %v989, %v985
    %v1302 = vpack.c.b16 %v990, %v986
    %v1303 = vpack.c.b16 %v995, %v991
    %v1304 = vpack.c.b16 %v996, %v992
    %v1305 = vpack.c.b16 %v997, %v993
    %v1306 = vpack.c.b16 %v998, %v994
    %v1307 = vpack.c.b16 %v1003, %v999
    %v1308 = vpack.c.b16 %v1004, %v1000
    %v1309 = vpack.c.b16 %v1005, %v1001
    %v1310 = vpack.c.b16 %v1006, %v1002
    %v1311 = vpack.c.b16 %v1011, %v1007
    %v1312 = vpack.c.b16 %v1012, %v1008
    %v1313 = vpack.c.b16 %v1013, %v1009
    %v1314 = vpack.c.b16 %v1014, %v1010
    %v1315 = vpack.c.b16 %v1019, %v1015
    %v1316 = vpack.c.b16 %v1020, %v1016
    %v1317 = vpack.c.b16 %v1021, %v1017
    %v1318 = vpack.c.b16 %v1022, %v1018
    %v1319 = vpack.c.b16 %v1027, %v1023
    %v1320 = vpack.c.b16 %v1028, %v1024
    %v1321 = vpack.c.b16 %v1029, %v1025
    %v1322 = vpack.c.b16 %v1030, %v1026
    %v1323 = vpack.c.b16 %v1035, %v1031
    %v1324 = vpack.c.b16 %v1036, %v1032
    %v1325 = vpack.c.b16 %v1037, %v1033
    %v1326 = vpack.c.b16 %v1038, %v1034
    %v1327 = vpack.c.b16 %v1043, %v1039
    %v1328 = vpack.c.b16 %v1044, %v1040
    %v1329 = vpack.c.b16 %v1045, %v1041
    %v1330 = vpack.c.b16 %v1046, %v1042
    %v1331 = vpack.c.b16 %v1051, %v1047
    %v1332 = vpack.c.b16 %v1052, %v1048
    %v1333 = vpack.c.b16 %v1053, %v1049
    %v1334 = vpack.c.b16 %v1054, %v1050
    %v1335 = vpack.c.b16 %v1059, %v1055
    %v1336 = vpack.c.b16 %v1060, %v1056
    %v1337 = vpack.c.b16 %v1061, %v1057
    %v1338 = vpack.c.b16 %v1062, %v1058
    %v1339 = vpack.c.b16 %v1067, %v1063
    %v1340 = vpack.c.b16 %v1068, %v1064
    %v1341 = vpack.c.b16 %v1069, %v1065
    %v1342 = vpack.c.b16 %v1070, %v1066
    %v1343 = vpack.c.b16 %v1075, %v1071
    %v1344 = vpack.c.b16 %v1076, %v1072
    %v1345 = vpack.c.b16 %v1077, %v1073
    %v1346 = vpack.c.b16 %v1078, %v1074
    %v1347 = vpack.c.b16 %v1083, %v1079
    %v1348 = vpack.c.b16 %v1084, %v1080
    %v1349 = vpack.c.b16 %v1085, %v1081
    %v1350 = vpack.c.b16 %v1086, %v1082
    %v1351 = vpack.c.b16 %v1091, %v1087
    %v1352 = vpack.c.b16 %v1092, %v1088
    %v1353 = vpack.c.b16 %v1093, %v1089
    %v1354 = vpack.c.b16 %v1094, %v1090
    %v1355 = vpack.c.b16 %v1099, %v1095
    %v1356 = vpack.c.b16 %v1100, %v1096
    %v1357 = vpack.c.b16 %v1101, %v1097
    %v1358 = vpack.c.b16 %v1102, %v1098
    %1615 = vmatprep.subr.bf16.mxu0 %v1104
    %1616 = vmatpush1.bf16.msra.mxu0 %v1103
    %1617 = vmatprep.subr.bf16.mxu0 %v1108
    %1618 = vmatpush1.bf16.msra.mxu0 %v1107
    %1619 = vmatprep.subr.bf16.mxu0 %v1112
    %1620 = vmatpush1.bf16.msra.mxu0 %v1111
    %1621 = vmatprep.subr.bf16.mxu0 %v1116
    %1622 = vmatpush1.bf16.msra.mxu0 %v1115
    %1623 = vmatprep.subr.bf16.mxu0 %v1120
    %1624 = vmatpush1.bf16.msra.mxu0 %v1119
    %1625 = vmatprep.subr.bf16.mxu0 %v1124
    %1626 = vmatpush1.bf16.msra.mxu0 %v1123
    %1627 = vmatprep.subr.bf16.mxu0 %v1128
    %1628 = vmatpush1.bf16.msra.mxu0 %v1127
    %1629 = vmatprep.subr.bf16.mxu0 %v1132
    %1630 = vmatpush1.bf16.msra.mxu0 %v1131
    %1631 = vmatprep.subr.bf16.mxu0 %v1136
    %1632 = vmatpush1.bf16.msra.mxu0 %v1135
    %1633 = vmatprep.subr.bf16.mxu0 %v1140
    %1634 = vmatpush1.bf16.msra.mxu0 %v1139
    %1635 = vmatprep.subr.bf16.mxu0 %v1144
    %1636 = vmatpush1.bf16.msra.mxu0 %v1143
    %1637 = vmatprep.subr.bf16.mxu0 %v1148
    %1638 = vmatpush1.bf16.msra.mxu0 %v1147
    %1639 = vmatprep.subr.bf16.mxu0 %v1152
    %1640 = vmatpush1.bf16.msra.mxu0 %v1151
    %1641 = vmatprep.subr.bf16.mxu0 %v1156
    %1642 = vmatpush1.bf16.msra.mxu0 %v1155
    %1643 = vmatprep.subr.bf16.mxu0 %v1160
    %1644 = vmatpush1.bf16.msra.mxu0 %v1159
    %1645 = vmatprep.subr.bf16.mxu0 %v1164
    %1646 = vmatpush1.bf16.msra.mxu0 %v1163
    %1647 = vmatprep.mubr.bf16.mxu0 %v50
    %1648 = vmatmul.mubr.bf16.gmra.mrb[0].mxu0 %v49
    %v1649 = vpop.f32.mrb[0].mxu0
    %v1650 = vadd.f32 %v318, %v1649
    %v1651 = vpop.f32.mrb[0].mxu0
    %v1652 = vadd.f32 %v322, %v1651
    %v1653 = vpop.f32.mrb[0].mxu0
    %v1654 = vpop.f32.mrb[0].mxu0
    %1655 = vdwg.mxu0
    %1656 = vmatprep.subr.bf16.mxu0 %v1168
    %1657 = vmatpush1.bf16.msra.mxu0 %v1167
    %1658 = vmatprep.subr.bf16.mxu0 %v1172
    %1659 = vmatpush1.bf16.msra.mxu0 %v1171
    %1660 = vmatprep.subr.bf16.mxu0 %v1176
    %1661 = vmatpush1.bf16.msra.mxu0 %v1175
    %1662 = vmatprep.subr.bf16.mxu0 %v1180
    %1663 = vmatpush1.bf16.msra.mxu0 %v1179
    %1664 = vmatprep.subr.bf16.mxu0 %v1184
    %1665 = vmatpush1.bf16.msra.mxu0 %v1183
    %1666 = vmatprep.subr.bf16.mxu0 %v1188
    %1667 = vmatpush1.bf16.msra.mxu0 %v1187
    %1668 = vmatprep.subr.bf16.mxu0 %v1192
    %1669 = vmatpush1.bf16.msra.mxu0 %v1191
    %1670 = vmatprep.subr.bf16.mxu0 %v1196
    %1671 = vmatpush1.bf16.msra.mxu0 %v1195
    %1672 = vmatprep.subr.bf16.mxu0 %v1200
    %1673 = vmatpush1.bf16.msra.mxu0 %v1199
    %1674 = vmatprep.subr.bf16.mxu0 %v1204
    %1675 = vmatpush1.bf16.msra.mxu0 %v1203
    %1676 = vmatprep.subr.bf16.mxu0 %v1208
    %1677 = vmatpush1.bf16.msra.mxu0 %v1207
    %1678 = vmatprep.subr.bf16.mxu0 %v1212
    %1679 = vmatpush1.bf16.msra.mxu0 %v1211
    %1680 = vmatprep.subr.bf16.mxu0 %v1216
    %1681 = vmatpush1.bf16.msra.mxu0 %v1215
    %1682 = vmatprep.subr.bf16.mxu0 %v1220
    %1683 = vmatpush1.bf16.msra.mxu0 %v1219
    %1684 = vmatprep.subr.bf16.mxu0 %v1224
    %1685 = vmatpush1.bf16.msra.mxu0 %v1223
    %1686 = vmatprep.subr.bf16.mxu0 %v1228
    %1687 = vmatpush1.bf16.msra.mxu0 %v1227
    %1688 = vmatprep.mubr.bf16.mxu0 %v52
    %1689 = vmatmul.mubr.bf16.gmra.mrb[0].mxu0 %v51
    %v1690 = vpop.f32.mrb[0].mxu0
    %v1691 = vadd.f32 %v1650, %v1690
    %v1692 = vpop.f32.mrb[0].mxu0
    %v1693 = vadd.f32 %v1652, %v1692
    %v1694 = vpop.f32.mrb[0].mxu0
    %v1695 = vpop.f32.mrb[0].mxu0
    %1696 = vdwg.mxu0
    %1697 = vmatprep.subr.bf16.mxu0 %v1232
    %1698 = vmatpush1.bf16.msra.mxu0 %v1231
    %1699 = vmatprep.subr.bf16.mxu0 %v1236
    %1700 = vmatpush1.bf16.msra.mxu0 %v1235
    %1701 = vmatprep.subr.bf16.mxu0 %v1240
    %1702 = vmatpush1.bf16.msra.mxu0 %v1239
    %1703 = vmatprep.subr.bf16.mxu0 %v1244
    %1704 = vmatpush1.bf16.msra.mxu0 %v1243
    %1705 = vmatprep.subr.bf16.mxu0 %v1248
    %1706 = vmatpush1.bf16.msra.mxu0 %v1247
    %1707 = vmatprep.subr.bf16.mxu0 %v1252
    %1708 = vmatpush1.bf16.msra.mxu0 %v1251
    %1709 = vmatprep.subr.bf16.mxu0 %v1256
    %1710 = vmatpush1.bf16.msra.mxu0 %v1255
    %1711 = vmatprep.subr.bf16.mxu0 %v1260
    %1712 = vmatpush1.bf16.msra.mxu0 %v1259
    %1713 = vmatprep.subr.bf16.mxu0 %v1264
    %1714 = vmatpush1.bf16.msra.mxu0 %v1263
    %1715 = vmatprep.subr.bf16.mxu0 %v1268
    %1716 = vmatpush1.bf16.msra.mxu0 %v1267
    %1717 = vmatprep.subr.bf16.mxu0 %v1272
    %1718 = vmatpush1.bf16.msra.mxu0 %v1271
    %1719 = vmatprep.subr.bf16.mxu0 %v1276
    %1720 = vmatpush1.bf16.msra.mxu0 %v1275
    %1721 = vmatprep.subr.bf16.mxu0 %v1280
    %1722 = vmatpush1.bf16.msra.mxu0 %v1279
    %1723 = vmatprep.subr.bf16.mxu0 %v1284
    %1724 = vmatpush1.bf16.msra.mxu0 %v1283
    %1725 = vmatprep.subr.bf16.mxu0 %v1288
    %1726 = vmatpush1.bf16.msra.mxu0 %v1287
    %1727 = vmatprep.subr.bf16.mxu0 %v1292
    %1728 = vmatpush1.bf16.msra.mxu0 %v1291
    %1729 = vmatprep.mubr.bf16.mxu0 %v54
    %1730 = vmatmul.mubr.bf16.gmra.mrb[0].mxu0 %v53
    %v1731 = vpop.f32.mrb[0].mxu0
    %v1732 = vadd.f32 %v1691, %v1731
    %v1733 = vpop.f32.mrb[0].mxu0
    %v1734 = vadd.f32 %v1693, %v1733
    %v1735 = vpop.f32.mrb[0].mxu0
    %v1736 = vpop.f32.mrb[0].mxu0
    %1737 = vdwg.mxu0
    %1738 = vmatprep.subr.bf16.mxu0 %v1296
    %1739 = vmatpush1.bf16.msra.mxu0 %v1295
    %1740 = vmatprep.subr.bf16.mxu0 %v1300
    %1741 = vmatpush1.bf16.msra.mxu0 %v1299
    %1742 = vmatprep.subr.bf16.mxu0 %v1304
    %1743 = vmatpush1.bf16.msra.mxu0 %v1303
    %1744 = vmatprep.subr.bf16.mxu0 %v1308
    %1745 = vmatpush1.bf16.msra.mxu0 %v1307
    %1746 = vmatprep.subr.bf16.mxu0 %v1312
    %1747 = vmatpush1.bf16.msra.mxu0 %v1311
    %1748 = vmatprep.subr.bf16.mxu0 %v1316
    %1749 = vmatpush1.bf16.msra.mxu0 %v1315
    %1750 = vmatprep.subr.bf16.mxu0 %v1320
    %1751 = vmatpush1.bf16.msra.mxu0 %v1319
    %1752 = vmatprep.subr.bf16.mxu0 %v1324
    %1753 = vmatpush1.bf16.msra.mxu0 %v1323
    %1754 = vmatprep.subr.bf16.mxu0 %v1328
    %1755 = vmatpush1.bf16.msra.mxu0 %v1327
    %1756 = vmatprep.subr.bf16.mxu0 %v1332
    %1757 = vmatpush1.bf16.msra.mxu0 %v1331
    %1758 = vmatprep.subr.bf16.mxu0 %v1336
    %1759 = vmatpush1.bf16.msra.mxu0 %v1335
    %1760 = vmatprep.subr.bf16.mxu0 %v1340
    %1761 = vmatpush1.bf16.msra.mxu0 %v1339
    %1762 = vmatprep.subr.bf16.mxu0 %v1344
    %1763 = vmatpush1.bf16.msra.mxu0 %v1343
    %1764 = vmatprep.subr.bf16.mxu0 %v1348
    %1765 = vmatpush1.bf16.msra.mxu0 %v1347
    %1766 = vmatprep.subr.bf16.mxu0 %v1352
    %1767 = vmatpush1.bf16.msra.mxu0 %v1351
    %1768 = vmatprep.subr.bf16.mxu0 %v1356
    %1769 = vmatpush1.bf16.msra.mxu0 %v1355
    %1770 = vmatprep.mubr.bf16.mxu0 %v56
    %1771 = vmatmul.mubr.bf16.gmra.mrb[0].mxu0 %v55
    %v1772 = vpop.f32.mrb[0].mxu0
    %v1773 = vadd.f32 %v1732, %v1772
    %v1774 = vpop.f32.mrb[0].mxu0
    %v1775 = vadd.f32 %v1734, %v1774
    %v1776 = vpop.f32.mrb[0].mxu0
    %v1777 = vpop.f32.mrb[0].mxu0
    %1778 = vdwg.mxu0
    %1779 = vmatprep.subr.bf16.mxu0 %v1106
    %1780 = vmatpush1.bf16.msra.mxu0 %v1105
    %1781 = vmatprep.subr.bf16.mxu0 %v1110
    %1782 = vmatpush1.bf16.msra.mxu0 %v1109
    %1783 = vmatprep.subr.bf16.mxu0 %v1114
    %1784 = vmatpush1.bf16.msra.mxu0 %v1113
    %1785 = vmatprep.subr.bf16.mxu0 %v1118
    %1786 = vmatpush1.bf16.msra.mxu0 %v1117
    %1787 = vmatprep.subr.bf16.mxu0 %v1122
    %1788 = vmatpush1.bf16.msra.mxu0 %v1121
    %1789 = vmatprep.subr.bf16.mxu0 %v1126
    %1790 = vmatpush1.bf16.msra.mxu0 %v1125
    %1791 = vmatprep.subr.bf16.mxu0 %v1130
    %1792 = vmatpush1.bf16.msra.mxu0 %v1129
    %1793 = vmatprep.subr.bf16.mxu0 %v1134
    %1794 = vmatpush1.bf16.msra.mxu0 %v1133
    %1795 = vmatprep.subr.bf16.mxu0 %v1138
    %1796 = vmatpush1.bf16.msra.mxu0 %v1137
    %1797 = vmatprep.subr.bf16.mxu0 %v1142
    %1798 = vmatpush1.bf16.msra.mxu0 %v1141
    %1799 = vmatprep.subr.bf16.mxu0 %v1146
    %1800 = vmatpush1.bf16.msra.mxu0 %v1145
    %1801 = vmatprep.subr.bf16.mxu0 %v1150
    %1802 = vmatpush1.bf16.msra.mxu0 %v1149
    %1803 = vmatprep.subr.bf16.mxu0 %v1154
    %1804 = vmatpush1.bf16.msra.mxu0 %v1153
    %1805 = vmatprep.subr.bf16.mxu0 %v1158
    %1806 = vmatpush1.bf16.msra.mxu0 %v1157
    %1807 = vmatprep.subr.bf16.mxu0 %v1162
    %1808 = vmatpush1.bf16.msra.mxu0 %v1161
    %1809 = vmatprep.subr.bf16.mxu0 %v1166
    %1810 = vmatpush1.bf16.msra.mxu0 %v1165
    %1811 = vmatprep.mubr.bf16.mxu0 %v50
    %1812 = vmatmul.mubr.bf16.gmra.mrb[0].mxu0 %v49
    %v1813 = vpop.f32.mrb[0].mxu0
    %v1814 = vadd.f32 %v326, %v1813
    %v1815 = vpop.f32.mrb[0].mxu0
    %v1816 = vadd.f32 %v330, %v1815
    %v1817 = vpop.f32.mrb[0].mxu0
    %v1818 = vpop.f32.mrb[0].mxu0
    %1819 = vdwg.mxu0
    %1820 = vmatprep.subr.bf16.mxu0 %v1170
    %1821 = vmatpush1.bf16.msra.mxu0 %v1169
    %1822 = vmatprep.subr.bf16.mxu0 %v1174
    %1823 = vmatpush1.bf16.msra.mxu0 %v1173
    %1824 = vmatprep.subr.bf16.mxu0 %v1178
    %1825 = vmatpush1.bf16.msra.mxu0 %v1177
    %1826 = vmatprep.subr.bf16.mxu0 %v1182
    %1827 = vmatpush1.bf16.msra.mxu0 %v1181
    %1828 = vmatprep.subr.bf16.mxu0 %v1186
    %1829 = vmatpush1.bf16.msra.mxu0 %v1185
    %1830 = vmatprep.subr.bf16.mxu0 %v1190
    %1831 = vmatpush1.bf16.msra.mxu0 %v1189
    %1832 = vmatprep.subr.bf16.mxu0 %v1194
    %1833 = vmatpush1.bf16.msra.mxu0 %v1193
    %1834 = vmatprep.subr.bf16.mxu0 %v1198
    %1835 = vmatpush1.bf16.msra.mxu0 %v1197
    %1836 = vmatprep.subr.bf16.mxu0 %v1202
    %1837 = vmatpush1.bf16.msra.mxu0 %v1201
    %1838 = vmatprep.subr.bf16.mxu0 %v1206
    %1839 = vmatpush1.bf16.msra.mxu0 %v1205
    %1840 = vmatprep.subr.bf16.mxu0 %v1210
    %1841 = vmatpush1.bf16.msra.mxu0 %v1209
    %1842 = vmatprep.subr.bf16.mxu0 %v1214
    %1843 = vmatpush1.bf16.msra.mxu0 %v1213
    %1844 = vmatprep.subr.bf16.mxu0 %v1218
    %1845 = vmatpush1.bf16.msra.mxu0 %v1217
    %1846 = vmatprep.subr.bf16.mxu0 %v1222
    %1847 = vmatpush1.bf16.msra.mxu0 %v1221
    %1848 = vmatprep.subr.bf16.mxu0 %v1226
    %1849 = vmatpush1.bf16.msra.mxu0 %v1225
    %1850 = vmatprep.subr.bf16.mxu0 %v1230
    %1851 = vmatpush1.bf16.msra.mxu0 %v1229
    %1852 = vmatprep.mubr.bf16.mxu0 %v52
    %1853 = vmatmul.mubr.bf16.gmra.mrb[0].mxu0 %v51
    %v1854 = vpop.f32.mrb[0].mxu0
    %v1855 = vadd.f32 %v1814, %v1854
    %v1856 = vpop.f32.mrb[0].mxu0
    %v1857 = vadd.f32 %v1816, %v1856
    %v1858 = vpop.f32.mrb[0].mxu0
    %v1859 = vpop.f32.mrb[0].mxu0
    %1860 = vdwg.mxu0
    %1861 = vmatprep.subr.bf16.mxu0 %v1234
    %1862 = vmatpush1.bf16.msra.mxu0 %v1233
    %1863 = vmatprep.subr.bf16.mxu0 %v1238
    %1864 = vmatpush1.bf16.msra.mxu0 %v1237
    %1865 = vmatprep.subr.bf16.mxu0 %v1242
    %1866 = vmatpush1.bf16.msra.mxu0 %v1241
    %1867 = vmatprep.subr.bf16.mxu0 %v1246
    %1868 = vmatpush1.bf16.msra.mxu0 %v1245
    %1869 = vmatprep.subr.bf16.mxu0 %v1250
    %1870 = vmatpush1.bf16.msra.mxu0 %v1249
    %1871 = vmatprep.subr.bf16.mxu0 %v1254
    %1872 = vmatpush1.bf16.msra.mxu0 %v1253
    %1873 = vmatprep.subr.bf16.mxu0 %v1258
    %1874 = vmatpush1.bf16.msra.mxu0 %v1257
    %1875 = vmatprep.subr.bf16.mxu0 %v1262
    %1876 = vmatpush1.bf16.msra.mxu0 %v1261
    %1877 = vmatprep.subr.bf16.mxu0 %v1266
    %1878 = vmatpush1.bf16.msra.mxu0 %v1265
    %1879 = vmatprep.subr.bf16.mxu0 %v1270
    %1880 = vmatpush1.bf16.msra.mxu0 %v1269
    %1881 = vmatprep.subr.bf16.mxu0 %v1274
    %1882 = vmatpush1.bf16.msra.mxu0 %v1273
    %1883 = vmatprep.subr.bf16.mxu0 %v1278
    %1884 = vmatpush1.bf16.msra.mxu0 %v1277
    %1885 = vmatprep.subr.bf16.mxu0 %v1282
    %1886 = vmatpush1.bf16.msra.mxu0 %v1281
    %1887 = vmatprep.subr.bf16.mxu0 %v1286
    %1888 = vmatpush1.bf16.msra.mxu0 %v1285
    %1889 = vmatprep.subr.bf16.mxu0 %v1290
    %1890 = vmatpush1.bf16.msra.mxu0 %v1289
    %1891 = vmatprep.subr.bf16.mxu0 %v1294
    %1892 = vmatpush1.bf16.msra.mxu0 %v1293
    %1893 = vmatprep.mubr.bf16.mxu0 %v54
    %1894 = vmatmul.mubr.bf16.gmra.mrb[0].mxu0 %v53
    %v1895 = vpop.f32.mrb[0].mxu0
    %v1896 = vadd.f32 %v1855, %v1895
    %v1897 = vpop.f32.mrb[0].mxu0
    %v1898 = vadd.f32 %v1857, %v1897
    %v1899 = vpop.f32.mrb[0].mxu0
    %v1900 = vpop.f32.mrb[0].mxu0
    %1901 = vdwg.mxu0
    %1902 = vmatprep.subr.bf16.mxu0 %v1298
    %1903 = vmatpush1.bf16.msra.mxu0 %v1297
    %1904 = vmatprep.subr.bf16.mxu0 %v1302
    %1905 = vmatpush1.bf16.msra.mxu0 %v1301
    %1906 = vmatprep.subr.bf16.mxu0 %v1306
    %1907 = vmatpush1.bf16.msra.mxu0 %v1305
    %1908 = vmatprep.subr.bf16.mxu0 %v1310
    %1909 = vmatpush1.bf16.msra.mxu0 %v1309
    %1910 = vmatprep.subr.bf16.mxu0 %v1314
    %1911 = vmatpush1.bf16.msra.mxu0 %v1313
    %1912 = vmatprep.subr.bf16.mxu0 %v1318
    %1913 = vmatpush1.bf16.msra.mxu0 %v1317
    %1914 = vmatprep.subr.bf16.mxu0 %v1322
    %1915 = vmatpush1.bf16.msra.mxu0 %v1321
    %1916 = vmatprep.subr.bf16.mxu0 %v1326
    %1917 = vmatpush1.bf16.msra.mxu0 %v1325
    %1918 = vmatprep.subr.bf16.mxu0 %v1330
    %1919 = vmatpush1.bf16.msra.mxu0 %v1329
    %1920 = vmatprep.subr.bf16.mxu0 %v1334
    %1921 = vmatpush1.bf16.msra.mxu0 %v1333
    %1922 = vmatprep.subr.bf16.mxu0 %v1338
    %1923 = vmatpush1.bf16.msra.mxu0 %v1337
    %1924 = vmatprep.subr.bf16.mxu0 %v1342
    %1925 = vmatpush1.bf16.msra.mxu0 %v1341
    %1926 = vmatprep.subr.bf16.mxu0 %v1346
    %1927 = vmatpush1.bf16.msra.mxu0 %v1345
    %1928 = vmatprep.subr.bf16.mxu0 %v1350
    %1929 = vmatpush1.bf16.msra.mxu0 %v1349
    %1930 = vmatprep.subr.bf16.mxu0 %v1354
    %1931 = vmatpush1.bf16.msra.mxu0 %v1353
    %1932 = vmatprep.subr.bf16.mxu0 %v1358
    %1933 = vmatpush1.bf16.msra.mxu0 %v1357
    %1934 = vmatprep.mubr.bf16.mxu0 %v56
    %1935 = vmatmul.mubr.bf16.gmra.mrb[0].mxu0 %v55
    %v1936 = vpop.f32.mrb[0].mxu0
    %v1937 = vadd.f32 %v1896, %v1936
    %v1938 = vpop.f32.mrb[0].mxu0
    %v1939 = vadd.f32 %v1898, %v1938
    %v1940 = vpop.f32.mrb[0].mxu0
    %v1941 = vpop.f32.mrb[0].mxu0
    %1942 = vdwg.mxu0
    %v1943 = vmax.f32 %v1773, 0.0
    %v1944 = vmax.f32 %v1775, 0.0
    %v1945 = vmax.f32 %v1937, 0.0
    %v1946 = vmax.f32 %v1939, 0.0
    %1947 = vst [vmem:[#allocation7] sm:$0xff] %v1943
    %1948 = vst [vmem:[#allocation7 + $0x8] sm:$0xff] %v1944
    %1949 = vst [vmem:[#allocation7 + $0x10] sm:$0xff] %v1945
    %1950 = vst [vmem:[#allocation7 + $0x18] sm:$0xff] %v1946
    // Predicated region
    $region22: #{tpu_custom_call.1} parent=1 // pred_check
      _
    $region23: #{tpu_custom_call.1} parent=1 // pred_check_branch
      %1952 = sbr.rel (0) target = $region25
    $region24: #{tpu_custom_call.1} parent=1 // pred_region
      %s1954 = ssub.s32 512, 512
      %1955 = vsyncadd [#allocation4], %s1954
      %s1957 = sshll.u32 [#allocation7], 4
      %s1958 = int_to_ptr.vmem [resolvable:$true] %s1957
      %1960 = dma.vmem_to_hbm [thread:$0]  %s1958, 512, %s3, [#allocation4]
    $region25: #{tpu_custom_call.1} parent=1 // pred_fallthru
      _
    // Predicated region
    $region26: #{tpu_custom_call.1} parent=1 // pred_check
      _
    $region27: #{tpu_custom_call.1} parent=1 // pred_check_branch
      %1962 = sbr.rel (0) target = $region29
    $region28: #{tpu_custom_call.1} parent=1 // pred_region
      %1963 = dma.done [#allocation4], 512
    $region29: #{tpu_custom_call.1} parent=1 // pred_fallthru
      _
    %1964 = vsyncpa [#allocation3], 1
    %1965 = vsyncpa [#allocation6], 1
    %1966 = vsyncpa [#allocation4], 1

</llo_original>
